<compile_context>
chip_gen: v6e
topology: v6e:2x2x1
jax: 0.10.0
libtpu: 0.0.40
codegen_flags: <defaults>
</compile_context>

<pallas_src>
import functools
import numpy as np
import jax
import jax.numpy as jnp
from jax import lax
from jax.experimental import pallas as pl
from jax.experimental.pallas import tpu as pltpu


# --------------------------------------------------------------------------
# Sub-pixel decomposition of ConvTranspose2d(K=5, stride=2, pad=2, out_pad=1):
# output row oh = 2*a + p only receives taps
#     p=0: kh in {4,2,0} from padded-input rows a+0, a+1, a+2
#     p=1: kh in {3,1}   from padded-input rows a+1, a+2
# (identically along columns), where the input is zero-padded by 1 per side.
# --------------------------------------------------------------------------
def _tap(p, d):
    """Kernel tap index for output phase p and window offset d (None = no tap)."""
    if p == 0:
        return 4 - 2 * d                       # d in {0, 1, 2}
    return 5 - 2 * d if d in (1, 2) else None  # d in {1, 2}


# ------------------------------ fused kernel ------------------------------
def _rn_fused_kernel(x_ref, w1_ref, b1_ref, bc1_ref, bc2_ref, wc1_hbm, wc2_hbm,
                     o_ref,
                     a1f, l1, a2f, l2, wc1v, wc2v, sem,
                     *, s1h, s1w, ci1, ci2, co2):
    # x_ref   : (B, Din)
    # w1_ref  : (Din, A1)      fc1 -> full padded conv1-input slab
    # b1_ref  : (1, A1)
    # bc1_ref : (1, 2*L2)      conv1 bias (both phases folded into N)
    # bc2_ref : (co2, 1, 4*s2w)
    # wc1_hbm : (3*L1, 2*L2)   conv1 weights, kept in HBM (manual DMA)
    # wc2_hbm : (co2, 3*L2, 4*s2w)  conv2 weights, kept in HBM (manual DMA)
    # o_ref   : (B, co2, s2h, 4*s2w) -- row-major == NCHW (B, co2, 2*s2h, 2*s2w)
    B = x_ref.shape[0]
    s2h, s2w = 2 * s1h, 2 * s1w
    L1 = (s1w + 2) * ci1           # one padded conv1-input row (channels-last)
    L2 = (s2w + 2) * ci2           # one padded conv2-input row (channels-last)
    K1, K2 = 3 * L1, 3 * L2
    prows2 = s2h + 2

    # ---- kick off the big weight DMAs; they overlap fc1 + lhs assembly below.
    cp1 = pltpu.make_async_copy(wc1_hbm, wc1v, sem.at[0])
    cp2 = pltpu.make_async_copy(wc2_hbm, wc2v, sem.at[1])
    cp1.start()
    cp2.start()

    # ---- fc1 + ReLU: one dot emits the whole zero-padded channels-last slab.
    h1 = jnp.dot(x_ref[...], w1_ref[...],
                 preferred_element_type=jnp.float32) + b1_ref[...]
    a1f[...] = jnp.maximum(h1, 0.0)                       # (B, A1), one store

    # ---- conv1 lhs: row a = [padded rows a, a+1, a+2] -> contiguous window.
    for a in range(s1h):
        l1[:, a, :] = a1f[:, a * L1: a * L1 + K1]
    lhs1 = l1[...].reshape(B * s1h, K1)                   # (B*s1h, 108)

    # ---- ConvTranspose #1 (sub-pixel) + ReLU: ONE dot, both phases in N.
    cp1.wait()
    z1 = jnp.dot(lhs1, wc1v[...],
                 preferred_element_type=jnp.float32) + bc1_ref[...]
    z1 = jnp.maximum(z1, 0.0).reshape(B, s1h, 2 * L2)     # (B, s1h, 320)

    # ---- scatter into the zero-padded conv2-input slab (flat rows of L2).
    zrow = jnp.zeros((B, L2), jnp.float32)
    a2f[:, 0:L2] = zrow                                    # top pad row
    a2f[:, (prows2 - 1) * L2: prows2 * L2] = zrow          # bottom pad row
    for a in range(s1h):
        # phase-0 and phase-1 rows of this row pair are already contiguous.
        a2f[:, (1 + 2 * a) * L2: (3 + 2 * a) * L2] = z1[:, a, :]

    # ---- conv2 lhs: row a' = [padded rows a', a'+1, a'+2] contiguous window.
    for a in range(s2h):
        l2[:, a, :] = a2f[:, a * L2: a * L2 + K2]
    lhs2 = l2[...].reshape(B * s2h, K2)                   # (B*s2h, 480)

    # ---- ConvTranspose #2 (sub-pixel) + sigmoid: one dot per output channel,
    #      emitted directly in NCHW order (lanes = two interleaved output rows).
    cp2.wait()
    for c in range(co2):
        acc = jnp.dot(lhs2, wc2v[c],
                      preferred_element_type=jnp.float32) + bc2_ref[c]
        o_ref[:, c, :, :] = jax.nn.sigmoid(acc).reshape(B, s2h, 4 * s2w)


# --------------------- init-time parameter preprocessing ---------------------
def init_rn_params(key, input_dims, output_dim):
    """Parameters in PyTorch layouts (used by the reference and preprocessing)."""
    H, W, C = input_dims
    ch, cw = H // 4, W // 4
    ks = jax.random.split(key, 6)

    def u(k, shape, fan_in):
        bound = 1.0 / np.sqrt(fan_in)
        return jax.random.uniform(k, shape, jnp.float32, -bound, bound)

    return {
        # PyTorch layouts: Linear (out, in); ConvTranspose2d (in, out, kH, kW)
        "fc1_w": u(ks[0], (6 * ch * cw, output_dim), output_dim),
        "fc1_b": u(ks[1], (6 * ch * cw,), output_dim),
        "conv1_w": u(ks[2], (6, 16, 5, 5), 6 * 25),
        "conv1_b": u(ks[3], (16,), 6 * 25),
        "conv2_w": u(ks[4], (16, C, 5, 5), 16 * 25),
        "conv2_b": u(ks[5], (C,), 16 * 25),
    }


def prepare_rn_params(params, input_dims):
    """One-time repacking of PyTorch-layout params into the kernel layouts."""
    H, W, C = input_dims
    # NOTE: matches torch .reshape(B, 6, W//4, H//4): conv rows = W//4, cols = H//4
    s1h, s1w = W // 4, H // 4
    s2h, s2w = 2 * s1h, 2 * s1w
    ci1, ci2 = 6, 16
    wp1, wp2 = s1w + 2, s2w + 2
    L1, L2 = wp1 * ci1, wp2 * ci2
    A1 = (s1h + 2) * L1
    K1, N1 = 3 * L1, 2 * L2
    K2, N2 = 3 * L2, 4 * s2w

    fcw = np.asarray(params["fc1_w"], np.float32)   # (6*s1h*s1w, Din)
    fcb = np.asarray(params["fc1_b"], np.float32)
    w1c = np.asarray(params["conv1_w"], np.float32)  # (6, 16, 5, 5)
    b1c = np.asarray(params["conv1_b"], np.float32)
    w2c = np.asarray(params["conv2_w"], np.float32)  # (16, C, 5, 5)
    b2c = np.asarray(params["conv2_b"], np.float32)
    co1 = w1c.shape[1]
    din = fcw.shape[1]

    # fc1: ONE (Din, A1) matrix emitting the full zero-padded channels-last
    # conv1-input slab (pad rows/cols = zero columns, zero bias).
    w1 = np.zeros((din, A1), np.float32)
    b1 = np.zeros((1, A1), np.float32)
    for i in range(s1h):
        for j in range(s1w):
            for c in range(ci1):
                o = c * (s1h * s1w) + i * s1w + j          # torch flat index
                lane = (1 + i) * L1 + (1 + j) * ci1 + c    # padded slab lane
                w1[:, lane] = fcw[o, :]
                b1[0, lane] = fcb[o]

    # conv1: K = (row-offset dr, padded col, in-ch); N = (row-phase p, padded
    # conv2-input column, out-ch).  Column taps/phases folded into the matrix.
    wc1 = np.zeros((K1, N1), np.float32)
    bc1 = np.zeros((1, N1), np.float32)
    for p in range(2):
        for dr in range(3):
            kh = _tap(p, dr)
            if kh is None:
                continue
            for q in range(2):
                for dc in range(3):
                    kw = _tap(q, dc)
                    if kw is None:
                        continue
                    for bp in range(s1w):
                        pc = bp + dc
                        base = p * L2 + (1 + 2 * bp + q) * ci2
                        for cc in range(ci1):
                            wc1[dr * L1 + pc * ci1 + cc, base:base + co1] = \
                                w1c[cc, :, kh, kw]
    for p in range(2):
        for bp in range(s1w):
            for q in range(2):
                base = p * L2 + (1 + 2 * bp + q) * ci2
                bc1[0, base:base + co1] = b1c

    # conv2: per out-channel; K = (row-offset dr, padded col, in-ch);
    # N lanes = two interleaved NCHW output rows (p, 2*bp+q).
    wc2 = np.zeros((C, K2, N2), np.float32)
    bc2 = np.zeros((C, 1, N2), np.float32)
    for c in range(C):
        bc2[c, 0, :] = b2c[c]
        for p in range(2):
            for dr in range(3):
                kh = _tap(p, dr)
                if kh is None:
                    continue
                for q in range(2):
                    for dc in range(3):
                        kw = _tap(q, dc)
                        if kw is None:
                            continue
                        for bp in range(s2w):
                            pc = bp + dc
                            lane = p * (2 * s2w) + 2 * bp + q
                            for cc in range(ci2):
                                wc2[c, dr * L2 + pc * ci2 + cc, lane] = \
                                    w2c[cc, c, kh, kw]

    return {"w1": jnp.asarray(w1), "b1": jnp.asarray(b1),
            "wc1": jnp.asarray(wc1), "bc1": jnp.asarray(bc1),
            "wc2": jnp.asarray(wc2), "bc2": jnp.asarray(bc2)}


# ------------------------------ forward (Pallas) ------------------------------
def rn_forward(x, prep, input_dims):
    H, W, C = input_dims
    s1h, s1w = W // 4, H // 4
    s2h, s2w = 2 * s1h, 2 * s1w
    ci1, ci2 = 6, 16
    B = x.shape[0]
    L1, L2 = (s1w + 2) * ci1, (s2w + 2) * ci2
    A1, A2 = (s1h + 2) * L1, (s2h + 2) * L2
    K1, K2 = 3 * L1, 3 * L2
    N1, N2 = 2 * L2, 4 * s2w

    kernel = functools.partial(_rn_fused_kernel, s1h=s1h, s1w=s1w,
                               ci1=ci1, ci2=ci2, co2=C)
    vmem = pl.BlockSpec(memory_space=pltpu.MemorySpace.VMEM)
    hbm = pl.BlockSpec(memory_space=pl.ANY)

    flops = 2 * (B * x.shape[1] * A1 + B * s1h * K1 * N1 + B * s2h * K2 * N2 * C)
    bytes_accessed = 4 * (x.size + prep["w1"].size + prep["b1"].size
                          + prep["bc1"].size + prep["bc2"].size
                          + prep["wc1"].size + prep["wc2"].size
                          + B * C * s2h * N2)
    cost = pl.CostEstimate(flops=flops,
                           transcendentals=B * C * s2h * N2,
                           bytes_accessed=bytes_accessed)

    out = pl.pallas_call(
        kernel,
        out_shape=jax.ShapeDtypeStruct((B, C, s2h, N2), jnp.float32),
        in_specs=[vmem, vmem, vmem, vmem, vmem, hbm, hbm],
        out_specs=vmem,
        scratch_shapes=[
            pltpu.VMEM((B, A1), jnp.float32),          # padded conv1 input (flat)
            pltpu.VMEM((B, s1h, K1), jnp.float32),     # conv1 lhs slab
            pltpu.VMEM((B, A2), jnp.float32),          # padded conv2 input (flat)
            pltpu.VMEM((B, s2h, K2), jnp.float32),     # conv2 lhs slab
            pltpu.VMEM((K1, N1), jnp.float32),         # conv1 weights (DMA dst)
            pltpu.VMEM((C, K2, N2), jnp.float32),      # conv2 weights (DMA dst)
            pltpu.SemaphoreType.DMA((2,)),
        ],
        cost_estimate=cost,
    )(x, prep["w1"], prep["b1"], prep["bc1"], prep["bc2"],
      prep["wc1"], prep["wc2"])
    # (B, C, s2h, 4*s2w) row-major == NCHW (B, C, 2*s2h, 2*s2w); reshape is free.
    return out.reshape(B, C, 2 * s2h, 2 * s2w)


# ------------------------- pure-JAX reference (XLA) -------------------------
def rn_reference(params, x, input_dims):
    H, W, C = input_dims
    ch, cw = H // 4, W // 4
    B = x.shape[0]
    h = jnp.maximum(jnp.dot(x, params["fc1_w"].T,
                            precision=lax.Precision.HIGHEST) + params["fc1_b"], 0.0)
    h = h.reshape(B, 6, cw, ch)

    def convT(x_nchw, w_pt, b, stride=2, pad=2, out_pad=1):
        K = w_pt.shape[2]
        w_oihw = jnp.transpose(jnp.flip(w_pt, axis=(2, 3)), (1, 0, 2, 3))
        out = lax.conv_general_dilated(
            x_nchw, w_oihw, window_strides=(1, 1),
            padding=[(K - 1 - pad, K - 1 - pad + out_pad)] * 2,
            lhs_dilation=(stride, stride),
            dimension_numbers=("NCHW", "OIHW", "NCHW"),
            precision=lax.Precision.HIGHEST)
        return out + b[None, :, None, None]

    h = jnp.maximum(convT(h, params["conv1_w"], params["conv1_b"]), 0.0)
    return jax.nn.sigmoid(convT(h, params["conv2_w"], params["conv2_b"]))


if __name__ == "__main__":
    input_dims = (16, 16, 3)   # (H, W, C) as interpreted by the PyTorch module
    output_dim = 8             # latent dim fed to fc1
    B = 2

    key = jax.random.PRNGKey(0)
    pkey, xkey = jax.random.split(key)
    params = init_rn_params(pkey, input_dims, output_dim)
    x = jax.random.normal(xkey, (B, output_dim), jnp.float32)

    prep = prepare_rn_params(params, input_dims)        # hoisted out of forward
    fwd = jax.jit(rn_forward, static_argnums=2)
    out = jax.block_until_ready(fwd(x, prep, input_dims))

    H, W, C = input_dims
    assert out.shape == (B, C, 4 * (W // 4), 4 * (H // 4)), out.shape

    ref = rn_reference(params, x, input_dims)
    err = float(np.max(np.abs(np.asarray(out) - np.asarray(ref))))
    assert err < 2e-4, err
    print("KERNEL_OK")
</pallas_src>

<mosaic_0001>
module attributes {stable_mosaic.version = 11 : i64} {
  func.func @_rn_fused_kernel(%arg0: memref<2x8xf32, #tpu.memory_space<vmem>>, %arg1: memref<8x216xf32, #tpu.memory_space<vmem>>, %arg2: memref<1x216xf32, #tpu.memory_space<vmem>>, %arg3: memref<1x320xf32, #tpu.memory_space<vmem>>, %arg4: memref<3x1x32xf32, #tpu.memory_space<vmem>>, %arg5: memref<108x320xf32, #tpu.memory_space<any>>, %arg6: memref<3x480x32xf32, #tpu.memory_space<any>>, %arg7: memref<2x3x8x32xf32, #tpu.memory_space<vmem>>, %arg8: memref<2x216xf32, #tpu.memory_space<vmem>>, %arg9: memref<2x4x108xf32, #tpu.memory_space<vmem>>, %arg10: memref<2x1600xf32, #tpu.memory_space<vmem>>, %arg11: memref<2x8x480xf32, #tpu.memory_space<vmem>>, %arg12: memref<108x320xf32, #tpu.memory_space<vmem>>, %arg13: memref<3x480x32xf32, #tpu.memory_space<vmem>>, %arg14: memref<2x!tpu.dma_semaphore, #tpu.memory_space<semaphore_mem>>) attributes {dimension_semantics = [], scalar_prefetch = 0 : i64, scratch_operands = 7 : i64, tpu.core_type = #tpu.core_type<tc>} {
    %c0_i32 = arith.constant 0 : i32
    %0 = tpu.memref_slice %arg14[%c0_i32] : memref<2x!tpu.dma_semaphore, #tpu.memory_space<semaphore_mem>> -> memref<1x!tpu.dma_semaphore, #tpu.memory_space<semaphore_mem>>
    %1 = tpu.memref_squeeze %0 : memref<1x!tpu.dma_semaphore, #tpu.memory_space<semaphore_mem>> -> memref<!tpu.dma_semaphore, #tpu.memory_space<semaphore_mem>>
    tpu.enqueue_dma source(%arg5 : memref<108x320xf32, #tpu.memory_space<any>>) target(%arg12 : memref<108x320xf32, #tpu.memory_space<vmem>>) target_semaphore(%1 : memref<!tpu.dma_semaphore, #tpu.memory_space<semaphore_mem>>)
    %c1_i32 = arith.constant 1 : i32
    %2 = tpu.memref_slice %arg14[%c1_i32] : memref<2x!tpu.dma_semaphore, #tpu.memory_space<semaphore_mem>> -> memref<1x!tpu.dma_semaphore, #tpu.memory_space<semaphore_mem>>
    %3 = tpu.memref_squeeze %2 : memref<1x!tpu.dma_semaphore, #tpu.memory_space<semaphore_mem>> -> memref<!tpu.dma_semaphore, #tpu.memory_space<semaphore_mem>>
    tpu.enqueue_dma source(%arg6 : memref<3x480x32xf32, #tpu.memory_space<any>>) target(%arg13 : memref<3x480x32xf32, #tpu.memory_space<vmem>>) target_semaphore(%3 : memref<!tpu.dma_semaphore, #tpu.memory_space<semaphore_mem>>)
    %c0 = arith.constant 0 : index
    %c0_0 = arith.constant 0 : index
    %4 = vector.load %arg0[%c0, %c0_0] : memref<2x8xf32, #tpu.memory_space<vmem>>, vector<2x8xf32>
    %c0_1 = arith.constant 0 : index
    %c0_2 = arith.constant 0 : index
    %5 = vector.load %arg1[%c0_1, %c0_2] : memref<8x216xf32, #tpu.memory_space<vmem>>, vector<8x216xf32>
    %cst = arith.constant dense<0.000000e+00> : vector<2x216xf32>
    %6 = tpu.matmul %4, %5, %cst {dimension_numbers = #tpu.dot_dimension_numbers<[1], [0], [0], [1], [0, 0, 1, 1], [], []>} : vector<2x8xf32>, vector<8x216xf32>, vector<2x216xf32> -> vector<2x216xf32>
    %c0_3 = arith.constant 0 : index
    %c0_4 = arith.constant 0 : index
    %7 = vector.load %arg2[%c0_3, %c0_4] : memref<1x216xf32, #tpu.memory_space<vmem>>, vector<1x216xf32>
    %8 = vector.broadcast %7 : vector<1x216xf32> to vector<2x216xf32>
    %9 = arith.addf %6, %8 : vector<2x216xf32>
    %cst_5 = arith.constant 0.000000e+00 : f32
    %10 = vector.broadcast %cst_5 : f32 to vector<2x216xf32>
    %11 = arith.maximumf %9, %10 : vector<2x216xf32>
    %c0_6 = arith.constant 0 : index
    %c0_7 = arith.constant 0 : index
    %12 = vector.load %arg8[%c0_6, %c0_7] : memref<2x216xf32, #tpu.memory_space<vmem>>, vector<2x216xf32>
    tpu.vector_store %arg8[%c0_6, %c0_7], %11 {strides = array<i32>} : memref<2x216xf32, #tpu.memory_space<vmem>>, vector<2x216xf32>,
    %c0_8 = arith.constant 0 : index
    %c0_9 = arith.constant 0 : index
    %13 = vector.load %arg8[%c0_8, %c0_9] : memref<2x216xf32, #tpu.memory_space<vmem>>, vector<2x108xf32>
    %c0_10 = arith.constant 0 : index
    %c0_11 = arith.constant 0 : index
    %c0_12 = arith.constant 0 : index
    %14 = vector.load %arg9[%c0_10, %c0_11, %c0_12] : memref<2x4x108xf32, #tpu.memory_space<vmem>>, vector<2x1x108xf32>
    %15 = vector.shape_cast %14 : vector<2x1x108xf32> to vector<2x108xf32>
    %16 = vector.shape_cast %13 : vector<2x108xf32> to vector<2x1x108xf32>
    tpu.vector_store %arg9[%c0_10, %c0_11, %c0_12], %16 {strides = array<i32>} : memref<2x4x108xf32, #tpu.memory_space<vmem>>, vector<2x1x108xf32>,
    %c0_13 = arith.constant 0 : index
    %c36 = arith.constant 36 : index
    %17 = vector.load %arg8[%c0_13, %c36] : memref<2x216xf32, #tpu.memory_space<vmem>>, vector<2x108xf32>
    %c0_14 = arith.constant 0 : index
    %c1 = arith.constant 1 : index
    %c0_15 = arith.constant 0 : index
    %18 = vector.load %arg9[%c0_14, %c1, %c0_15] : memref<2x4x108xf32, #tpu.memory_space<vmem>>, vector<2x1x108xf32>
    %19 = vector.shape_cast %18 : vector<2x1x108xf32> to vector<2x108xf32>
    %20 = vector.shape_cast %17 : vector<2x108xf32> to vector<2x1x108xf32>
    tpu.vector_store %arg9[%c0_14, %c1, %c0_15], %20 {strides = array<i32>} : memref<2x4x108xf32, #tpu.memory_space<vmem>>, vector<2x1x108xf32>,
    %c0_16 = arith.constant 0 : index
    %c72 = arith.constant 72 : index
    %21 = vector.load %arg8[%c0_16, %c72] : memref<2x216xf32, #tpu.memory_space<vmem>>, vector<2x108xf32>
    %c0_17 = arith.constant 0 : index
    %c2 = arith.constant 2 : index
    %c0_18 = arith.constant 0 : index
    %22 = vector.load %arg9[%c0_17, %c2, %c0_18] : memref<2x4x108xf32, #tpu.memory_space<vmem>>, vector<2x1x108xf32>
    %23 = vector.shape_cast %22 : vector<2x1x108xf32> to vector<2x108xf32>
    %24 = vector.shape_cast %21 : vector<2x108xf32> to vector<2x1x108xf32>
    tpu.vector_store %arg9[%c0_17, %c2, %c0_18], %24 {strides = array<i32>} : memref<2x4x108xf32, #tpu.memory_space<vmem>>, vector<2x1x108xf32>,
    %c0_19 = arith.constant 0 : index
    %c108 = arith.constant 108 : index
    %25 = vector.load %arg8[%c0_19, %c108] : memref<2x216xf32, #tpu.memory_space<vmem>>, vector<2x108xf32>
    %c0_20 = arith.constant 0 : index
    %c3 = arith.constant 3 : index
    %c0_21 = arith.constant 0 : index
    %26 = vector.load %arg9[%c0_20, %c3, %c0_21] : memref<2x4x108xf32, #tpu.memory_space<vmem>>, vector<2x1x108xf32>
    %27 = vector.shape_cast %26 : vector<2x1x108xf32> to vector<2x108xf32>
    %28 = vector.shape_cast %25 : vector<2x108xf32> to vector<2x1x108xf32>
    tpu.vector_store %arg9[%c0_20, %c3, %c0_21], %28 {strides = array<i32>} : memref<2x4x108xf32, #tpu.memory_space<vmem>>, vector<2x1x108xf32>,
    %c0_22 = arith.constant 0 : index
    %c0_23 = arith.constant 0 : index
    %c0_24 = arith.constant 0 : index
    %29 = vector.load %arg9[%c0_22, %c0_23, %c0_24] : memref<2x4x108xf32, #tpu.memory_space<vmem>>, vector<2x4x108xf32>
    %30 = vector.shape_cast %29 : vector<2x4x108xf32> to vector<8x108xf32>
    %c0_i32_25 = arith.constant 0 : i32
    %31 = tpu.memref_slice %arg14[%c0_i32_25] : memref<2x!tpu.dma_semaphore, #tpu.memory_space<semaphore_mem>> -> memref<1x!tpu.dma_semaphore, #tpu.memory_space<semaphore_mem>>
    %32 = tpu.memref_squeeze %31 : memref<1x!tpu.dma_semaphore, #tpu.memory_space<semaphore_mem>> -> memref<!tpu.dma_semaphore, #tpu.memory_space<semaphore_mem>>
    tpu.wait_dma2 semaphore(%32 : memref<!tpu.dma_semaphore, #tpu.memory_space<semaphore_mem>>) src(%arg5 : memref<108x320xf32, #tpu.memory_space<any>>) dst(%arg12 : memref<108x320xf32, #tpu.memory_space<vmem>>)
    %c0_26 = arith.constant 0 : index
    %c0_27 = arith.constant 0 : index
    %33 = vector.load %arg12[%c0_26, %c0_27] : memref<108x320xf32, #tpu.memory_space<vmem>>, vector<108x320xf32>
    %cst_28 = arith.constant dense<0.000000e+00> : vector<8x320xf32>
    %34 = tpu.matmul %30, %33, %cst_28 {dimension_numbers = #tpu.dot_dimension_numbers<[1], [0], [0], [1], [0, 0, 1, 1], [], []>} : vector<8x108xf32>, vector<108x320xf32>, vector<8x320xf32> -> vector<8x320xf32>
    %c0_29 = arith.constant 0 : index
    %c0_30 = arith.constant 0 : index
    %35 = vector.load %arg3[%c0_29, %c0_30] : memref<1x320xf32, #tpu.memory_space<vmem>>, vector<1x320xf32>
    %36 = vector.broadcast %35 : vector<1x320xf32> to vector<8x320xf32>
    %37 = arith.addf %34, %36 : vector<8x320xf32>
    %cst_31 = arith.constant 0.000000e+00 : f32
    %38 = vector.broadcast %cst_31 : f32 to vector<8x320xf32>
    %39 = arith.maximumf %37, %38 : vector<8x320xf32>
    %40 = vector.shape_cast %39 : vector<8x320xf32> to vector<2x4x320xf32>
    %cst_32 = arith.constant 0.000000e+00 : f32
    %41 = vector.broadcast %cst_32 : f32 to vector<2x160xf32>
    %c0_33 = arith.constant 0 : index
    %c0_34 = arith.constant 0 : index
    %42 = vector.load %arg10[%c0_33, %c0_34] : memref<2x1600xf32, #tpu.memory_space<vmem>>, vector<2x160xf32>
    tpu.vector_store %arg10[%c0_33, %c0_34], %41 {strides = array<i32>} : memref<2x1600xf32, #tpu.memory_space<vmem>>, vector<2x160xf32>,
    %c0_35 = arith.constant 0 : index
    %c1440 = arith.constant 1440 : index
    %43 = vector.load %arg10[%c0_35, %c1440] : memref<2x1600xf32, #tpu.memory_space<vmem>>, vector<2x160xf32>
    tpu.vector_store %arg10[%c0_35, %c1440], %41 {strides = array<i32>} : memref<2x1600xf32, #tpu.memory_space<vmem>>, vector<2x160xf32>,
    %44 = vector.extract_strided_slice %40 {offsets = [0, 0, 0], sizes = [2, 1, 320], strides = [1, 1, 1]} : vector<2x4x320xf32> to vector<2x1x320xf32>
    %45 = vector.shape_cast %44 : vector<2x1x320xf32> to vector<2x320xf32>
    %c0_36 = arith.constant 0 : index
    %c160 = arith.constant 160 : index
    %46 = vector.load %arg10[%c0_36, %c160] : memref<2x1600xf32, #tpu.memory_space<vmem>>, vector<2x320xf32>
    tpu.vector_store %arg10[%c0_36, %c160], %45 {strides = array<i32>} : memref<2x1600xf32, #tpu.memory_space<vmem>>, vector<2x320xf32>,
    %47 = vector.extract_strided_slice %40 {offsets = [0, 1, 0], sizes = [2, 1, 320], strides = [1, 1, 1]} : vector<2x4x320xf32> to vector<2x1x320xf32>
    %48 = vector.shape_cast %47 : vector<2x1x320xf32> to vector<2x320xf32>
    %c0_37 = arith.constant 0 : index
    %c480 = arith.constant 480 : index
    %49 = vector.load %arg10[%c0_37, %c480] : memref<2x1600xf32, #tpu.memory_space<vmem>>, vector<2x320xf32>
    tpu.vector_store %arg10[%c0_37, %c480], %48 {strides = array<i32>} : memref<2x1600xf32, #tpu.memory_space<vmem>>, vector<2x320xf32>,
    %50 = vector.extract_strided_slice %40 {offsets = [0, 2, 0], sizes = [2, 1, 320], strides = [1, 1, 1]} : vector<2x4x320xf32> to vector<2x1x320xf32>
    %51 = vector.shape_cast %50 : vector<2x1x320xf32> to vector<2x320xf32>
    %c0_38 = arith.constant 0 : index
    %c800 = arith.constant 800 : index
    %52 = vector.load %arg10[%c0_38, %c800] : memref<2x1600xf32, #tpu.memory_space<vmem>>, vector<2x320xf32>
    tpu.vector_store %arg10[%c0_38, %c800], %51 {strides = array<i32>} : memref<2x1600xf32, #tpu.memory_space<vmem>>, vector<2x320xf32>,
    %53 = vector.extract_strided_slice %40 {offsets = [0, 3, 0], sizes = [2, 1, 320], strides = [1, 1, 1]} : vector<2x4x320xf32> to vector<2x1x320xf32>
    %54 = vector.shape_cast %53 : vector<2x1x320xf32> to vector<2x320xf32>
    %c0_39 = arith.constant 0 : index
    %c1120 = arith.constant 1120 : index
    %55 = vector.load %arg10[%c0_39, %c1120] : memref<2x1600xf32, #tpu.memory_space<vmem>>, vector<2x320xf32>
    tpu.vector_store %arg10[%c0_39, %c1120], %54 {strides = array<i32>} : memref<2x1600xf32, #tpu.memory_space<vmem>>, vector<2x320xf32>,
    %c0_40 = arith.constant 0 : index
    %c0_41 = arith.constant 0 : index
    %56 = vector.load %arg10[%c0_40, %c0_41] : memref<2x1600xf32, #tpu.memory_space<vmem>>, vector<2x480xf32>
    %c0_42 = arith.constant 0 : index
    %c0_43 = arith.constant 0 : index
    %c0_44 = arith.constant 0 : index
    %57 = vector.load %arg11[%c0_42, %c0_43, %c0_44] : memref<2x8x480xf32, #tpu.memory_space<vmem>>, vector<2x1x480xf32>
    %58 = vector.shape_cast %57 : vector<2x1x480xf32> to vector<2x480xf32>
    %59 = vector.shape_cast %56 : vector<2x480xf32> to vector<2x1x480xf32>
    tpu.vector_store %arg11[%c0_42, %c0_43, %c0_44], %59 {strides = array<i32>} : memref<2x8x480xf32, #tpu.memory_space<vmem>>, vector<2x1x480xf32>,
    %c0_45 = arith.constant 0 : index
    %c160_46 = arith.constant 160 : index
    %60 = vector.load %arg10[%c0_45, %c160_46] : memref<2x1600xf32, #tpu.memory_space<vmem>>, vector<2x480xf32>
    %c0_47 = arith.constant 0 : index
    %c1_48 = arith.constant 1 : index
    %c0_49 = arith.constant 0 : index
    %61 = vector.load %arg11[%c0_47, %c1_48, %c0_49] : memref<2x8x480xf32, #tpu.memory_space<vmem>>, vector<2x1x480xf32>
    %62 = vector.shape_cast %61 : vector<2x1x480xf32> to vector<2x480xf32>
    %63 = vector.shape_cast %60 : vector<2x480xf32> to vector<2x1x480xf32>
    tpu.vector_store %arg11[%c0_47, %c1_48, %c0_49], %63 {strides = array<i32>} : memref<2x8x480xf32, #tpu.memory_space<vmem>>, vector<2x1x480xf32>,
    %c0_50 = arith.constant 0 : index
    %c320 = arith.constant 320 : index
    %64 = vector.load %arg10[%c0_50, %c320] : memref<2x1600xf32, #tpu.memory_space<vmem>>, vector<2x480xf32>
    %c0_51 = arith.constant 0 : index
    %c2_52 = arith.constant 2 : index
    %c0_53 = arith.constant 0 : index
    %65 = vector.load %arg11[%c0_51, %c2_52, %c0_53] : memref<2x8x480xf32, #tpu.memory_space<vmem>>, vector<2x1x480xf32>
    %66 = vector.shape_cast %65 : vector<2x1x480xf32> to vector<2x480xf32>
    %67 = vector.shape_cast %64 : vector<2x480xf32> to vector<2x1x480xf32>
    tpu.vector_store %arg11[%c0_51, %c2_52, %c0_53], %67 {strides = array<i32>} : memref<2x8x480xf32, #tpu.memory_space<vmem>>, vector<2x1x480xf32>,
    %c0_54 = arith.constant 0 : index
    %c480_55 = arith.constant 480 : index
    %68 = vector.load %arg10[%c0_54, %c480_55] : memref<2x1600xf32, #tpu.memory_space<vmem>>, vector<2x480xf32>
    %c0_56 = arith.constant 0 : index
    %c3_57 = arith.constant 3 : index
    %c0_58 = arith.constant 0 : index
    %69 = vector.load %arg11[%c0_56, %c3_57, %c0_58] : memref<2x8x480xf32, #tpu.memory_space<vmem>>, vector<2x1x480xf32>
    %70 = vector.shape_cast %69 : vector<2x1x480xf32> to vector<2x480xf32>
    %71 = vector.shape_cast %68 : vector<2x480xf32> to vector<2x1x480xf32>
    tpu.vector_store %arg11[%c0_56, %c3_57, %c0_58], %71 {strides = array<i32>} : memref<2x8x480xf32, #tpu.memory_space<vmem>>, vector<2x1x480xf32>,
    %c0_59 = arith.constant 0 : index
    %c640 = arith.constant 640 : index
    %72 = vector.load %arg10[%c0_59, %c640] : memref<2x1600xf32, #tpu.memory_space<vmem>>, vector<2x480xf32>
    %c0_60 = arith.constant 0 : index
    %c4 = arith.constant 4 : index
    %c0_61 = arith.constant 0 : index
    %73 = vector.load %arg11[%c0_60, %c4, %c0_61] : memref<2x8x480xf32, #tpu.memory_space<vmem>>, vector<2x1x480xf32>
    %74 = vector.shape_cast %73 : vector<2x1x480xf32> to vector<2x480xf32>
    %75 = vector.shape_cast %72 : vector<2x480xf32> to vector<2x1x480xf32>
    tpu.vector_store %arg11[%c0_60, %c4, %c0_61], %75 {strides = array<i32>} : memref<2x8x480xf32, #tpu.memory_space<vmem>>, vector<2x1x480xf32>,
    %c0_62 = arith.constant 0 : index
    %c800_63 = arith.constant 800 : index
    %76 = vector.load %arg10[%c0_62, %c800_63] : memref<2x1600xf32, #tpu.memory_space<vmem>>, vector<2x480xf32>
    %c0_64 = arith.constant 0 : index
    %c5 = arith.constant 5 : index
    %c0_65 = arith.constant 0 : index
    %77 = vector.load %arg11[%c0_64, %c5, %c0_65] : memref<2x8x480xf32, #tpu.memory_space<vmem>>, vector<2x1x480xf32>
    %78 = vector.shape_cast %77 : vector<2x1x480xf32> to vector<2x480xf32>
    %79 = vector.shape_cast %76 : vector<2x480xf32> to vector<2x1x480xf32>
    tpu.vector_store %arg11[%c0_64, %c5, %c0_65], %79 {strides = array<i32>} : memref<2x8x480xf32, #tpu.memory_space<vmem>>, vector<2x1x480xf32>,
    %c0_66 = arith.constant 0 : index
    %c960 = arith.constant 960 : index
    %80 = vector.load %arg10[%c0_66, %c960] : memref<2x1600xf32, #tpu.memory_space<vmem>>, vector<2x480xf32>
    %c0_67 = arith.constant 0 : index
    %c6 = arith.constant 6 : index
    %c0_68 = arith.constant 0 : index
    %81 = vector.load %arg11[%c0_67, %c6, %c0_68] : memref<2x8x480xf32, #tpu.memory_space<vmem>>, vector<2x1x480xf32>
    %82 = vector.shape_cast %81 : vector<2x1x480xf32> to vector<2x480xf32>
    %83 = vector.shape_cast %80 : vector<2x480xf32> to vector<2x1x480xf32>
    tpu.vector_store %arg11[%c0_67, %c6, %c0_68], %83 {strides = array<i32>} : memref<2x8x480xf32, #tpu.memory_space<vmem>>, vector<2x1x480xf32>,
    %c0_69 = arith.constant 0 : index
    %c1120_70 = arith.constant 1120 : index
    %84 = vector.load %arg10[%c0_69, %c1120_70] : memref<2x1600xf32, #tpu.memory_space<vmem>>, vector<2x480xf32>
    %c0_71 = arith.constant 0 : index
    %c7 = arith.constant 7 : index
    %c0_72 = arith.constant 0 : index
    %85 = vector.load %arg11[%c0_71, %c7, %c0_72] : memref<2x8x480xf32, #tpu.memory_space<vmem>>, vector<2x1x480xf32>
    %86 = vector.shape_cast %85 : vector<2x1x480xf32> to vector<2x480xf32>
    %87 = vector.shape_cast %84 : vector<2x480xf32> to vector<2x1x480xf32>
    tpu.vector_store %arg11[%c0_71, %c7, %c0_72], %87 {strides = array<i32>} : memref<2x8x480xf32, #tpu.memory_space<vmem>>, vector<2x1x480xf32>,
    %c0_73 = arith.constant 0 : index
    %c0_74 = arith.constant 0 : index
    %c0_75 = arith.constant 0 : index
    %88 = vector.load %arg11[%c0_73, %c0_74, %c0_75] : memref<2x8x480xf32, #tpu.memory_space<vmem>>, vector<2x8x480xf32>
    %89 = vector.shape_cast %88 : vector<2x8x480xf32> to vector<16x480xf32>
    %c1_i32_76 = arith.constant 1 : i32
    %90 = tpu.memref_slice %arg14[%c1_i32_76] : memref<2x!tpu.dma_semaphore, #tpu.memory_space<semaphore_mem>> -> memref<1x!tpu.dma_semaphore, #tpu.memory_space<semaphore_mem>>
    %91 = tpu.memref_squeeze %90 : memref<1x!tpu.dma_semaphore, #tpu.memory_space<semaphore_mem>> -> memref<!tpu.dma_semaphore, #tpu.memory_space<semaphore_mem>>
    tpu.wait_dma2 semaphore(%91 : memref<!tpu.dma_semaphore, #tpu.memory_space<semaphore_mem>>) src(%arg6 : memref<3x480x32xf32, #tpu.memory_space<any>>) dst(%arg13 : memref<3x480x32xf32, #tpu.memory_space<vmem>>)
    %c0_77 = arith.constant 0 : index
    %c0_78 = arith.constant 0 : index
    %c0_79 = arith.constant 0 : index
    %92 = vector.load %arg13[%c0_77, %c0_78, %c0_79] : memref<3x480x32xf32, #tpu.memory_space<vmem>>, vector<1x480x32xf32>
    %93 = vector.shape_cast %92 : vector<1x480x32xf32> to vector<480x32xf32>
    %cst_80 = arith.constant dense<0.000000e+00> : vector<16x32xf32>
    %94 = tpu.matmul %89, %93, %cst_80 {dimension_numbers = #tpu.dot_dimension_numbers<[1], [0], [0], [1], [0, 0, 1, 1], [], []>} : vector<16x480xf32>, vector<480x32xf32>, vector<16x32xf32> -> vector<16x32xf32>
    %c0_81 = arith.constant 0 : index
    %c0_82 = arith.constant 0 : index
    %c0_83 = arith.constant 0 : index
    %95 = vector.load %arg4[%c0_81, %c0_82, %c0_83] : memref<3x1x32xf32, #tpu.memory_space<vmem>>, vector<1x1x32xf32>
    %96 = vector.shape_cast %95 : vector<1x1x32xf32> to vector<1x32xf32>
    %97 = vector.broadcast %96 : vector<1x32xf32> to vector<16x32xf32>
    %98 = arith.addf %94, %97 : vector<16x32xf32>
    %99 = arith.negf %98 : vector<16x32xf32>
    %100 = math.exp %99 : vector<16x32xf32>
    %cst_84 = arith.constant 1.000000e+00 : f32
    %101 = vector.broadcast %cst_84 : f32 to vector<16x32xf32>
    %102 = arith.addf %101, %100 : vector<16x32xf32>
    %103 = arith.divf %101, %102 : vector<16x32xf32>
    %104 = vector.shape_cast %103 : vector<16x32xf32> to vector<2x8x32xf32>
    %c0_85 = arith.constant 0 : index
    %c0_86 = arith.constant 0 : index
    %c0_87 = arith.constant 0 : index
    %c0_88 = arith.constant 0 : index
    %105 = vector.load %arg7[%c0_85, %c0_86, %c0_87, %c0_88] : memref<2x3x8x32xf32, #tpu.memory_space<vmem>>, vector<2x1x8x32xf32>
    %106 = vector.shape_cast %105 : vector<2x1x8x32xf32> to vector<2x8x32xf32>
    %107 = vector.shape_cast %104 : vector<2x8x32xf32> to vector<2x1x8x32xf32>
    tpu.vector_store %arg7[%c0_85, %c0_86, %c0_87, %c0_88], %107 {strides = array<i32>} : memref<2x3x8x32xf32, #tpu.memory_space<vmem>>, vector<2x1x8x32xf32>,
    %c1_89 = arith.constant 1 : index
    %c0_90 = arith.constant 0 : index
    %c0_91 = arith.constant 0 : index
    %108 = vector.load %arg13[%c1_89, %c0_90, %c0_91] : memref<3x480x32xf32, #tpu.memory_space<vmem>>, vector<1x480x32xf32>
    %109 = vector.shape_cast %108 : vector<1x480x32xf32> to vector<480x32xf32>
    %cst_92 = arith.constant dense<0.000000e+00> : vector<16x32xf32>
    %110 = tpu.matmul %89, %109, %cst_92 {dimension_numbers = #tpu.dot_dimension_numbers<[1], [0], [0], [1], [0, 0, 1, 1], [], []>} : vector<16x480xf32>, vector<480x32xf32>, vector<16x32xf32> -> vector<16x32xf32>
    %c1_93 = arith.constant 1 : index
    %c0_94 = arith.constant 0 : index
    %c0_95 = arith.constant 0 : index
    %111 = vector.load %arg4[%c1_93, %c0_94, %c0_95] : memref<3x1x32xf32, #tpu.memory_space<vmem>>, vector<1x1x32xf32>
    %112 = vector.shape_cast %111 : vector<1x1x32xf32> to vector<1x32xf32>
    %113 = vector.broadcast %112 : vector<1x32xf32> to vector<16x32xf32>
    %114 = arith.addf %110, %113 : vector<16x32xf32>
    %115 = arith.negf %114 : vector<16x32xf32>
    %116 = math.exp %115 : vector<16x32xf32>
    %cst_96 = arith.constant 1.000000e+00 : f32
    %117 = vector.broadcast %cst_96 : f32 to vector<16x32xf32>
    %118 = arith.addf %117, %116 : vector<16x32xf32>
    %119 = arith.divf %117, %118 : vector<16x32xf32>
    %120 = vector.shape_cast %119 : vector<16x32xf32> to vector<2x8x32xf32>
    %c0_97 = arith.constant 0 : index
    %c1_98 = arith.constant 1 : index
    %c0_99 = arith.constant 0 : index
    %c0_100 = arith.constant 0 : index
    %121 = vector.load %arg7[%c0_97, %c1_98, %c0_99, %c0_100] : memref<2x3x8x32xf32, #tpu.memory_space<vmem>>, vector<2x1x8x32xf32>
    %122 = vector.shape_cast %121 : vector<2x1x8x32xf32> to vector<2x8x32xf32>
    %123 = vector.shape_cast %120 : vector<2x8x32xf32> to vector<2x1x8x32xf32>
    tpu.vector_store %arg7[%c0_97, %c1_98, %c0_99, %c0_100], %123 {strides = array<i32>} : memref<2x3x8x32xf32, #tpu.memory_space<vmem>>, vector<2x1x8x32xf32>,
    %c2_101 = arith.constant 2 : index
    %c0_102 = arith.constant 0 : index
    %c0_103 = arith.constant 0 : index
    %124 = vector.load %arg13[%c2_101, %c0_102, %c0_103] : memref<3x480x32xf32, #tpu.memory_space<vmem>>, vector<1x480x32xf32>
    %125 = vector.shape_cast %124 : vector<1x480x32xf32> to vector<480x32xf32>
    %cst_104 = arith.constant dense<0.000000e+00> : vector<16x32xf32>
    %126 = tpu.matmul %89, %125, %cst_104 {dimension_numbers = #tpu.dot_dimension_numbers<[1], [0], [0], [1], [0, 0, 1, 1], [], []>} : vector<16x480xf32>, vector<480x32xf32>, vector<16x32xf32> -> vector<16x32xf32>
    %c2_105 = arith.constant 2 : index
    %c0_106 = arith.constant 0 : index
    %c0_107 = arith.constant 0 : index
    %127 = vector.load %arg4[%c2_105, %c0_106, %c0_107] : memref<3x1x32xf32, #tpu.memory_space<vmem>>, vector<1x1x32xf32>
    %128 = vector.shape_cast %127 : vector<1x1x32xf32> to vector<1x32xf32>
    %129 = vector.broadcast %128 : vector<1x32xf32> to vector<16x32xf32>
    %130 = arith.addf %126, %129 : vector<16x32xf32>
    %131 = arith.negf %130 : vector<16x32xf32>
    %132 = math.exp %131 : vector<16x32xf32>
    %cst_108 = arith.constant 1.000000e+00 : f32
    %133 = vector.broadcast %cst_108 : f32 to vector<16x32xf32>
    %134 = arith.addf %133, %132 : vector<16x32xf32>
    %135 = arith.divf %133, %134 : vector<16x32xf32>
    %136 = vector.shape_cast %135 : vector<16x32xf32> to vector<2x8x32xf32>
    %c0_109 = arith.constant 0 : index
    %c2_110 = arith.constant 2 : index
    %c0_111 = arith.constant 0 : index
    %c0_112 = arith.constant 0 : index
    %137 = vector.load %arg7[%c0_109, %c2_110, %c0_111, %c0_112] : memref<2x3x8x32xf32, #tpu.memory_space<vmem>>, vector<2x1x8x32xf32>
    %138 = vector.shape_cast %137 : vector<2x1x8x32xf32> to vector<2x8x32xf32>
    %139 = vector.shape_cast %136 : vector<2x8x32xf32> to vector<2x1x8x32xf32>
    tpu.vector_store %arg7[%c0_109, %c2_110, %c0_111, %c0_112], %139 {strides = array<i32>} : memref<2x3x8x32xf32, #tpu.memory_space<vmem>>, vector<2x1x8x32xf32>,
    return
  }
}

</mosaic_0001>

<llo_original>
// kernel: rn_forward.1
$region0: #{rn_forward.1}
  #allocation0 [shape = 'u32[]', space=smem, size = 0x4, offset = 0x4, fixed_abs, tag = 'smem constant byte address 0x4 - core index']
  #allocation1 [shape = 'u32[144,128]{1,0:T(1,128)}', space=vmem, size = 0x12000, scoped, tag = 'internal scratch']
  #allocation2 [shape = 'f32[2,216]{1,0:T(2,128)}', space=vmem, size = 0x800, scoped, tag = 'scratch operand']
  #allocation3 [shape = 'f32[2,4,108]{2,1,0:T(4,128)}', space=vmem, size = 0x1000, scoped, tag = 'scratch operand']
  #allocation4 [shape = 'f32[2,1600]{1,0:T(2,128)}', space=vmem, size = 0x3400, scoped, tag = 'scratch operand']
  #allocation5 [shape = 'f32[2,8,480]{2,1,0:T(8,128)}', space=vmem, size = 0x8000, scoped, tag = 'scratch operand']
  #allocation6 [shape = 'f32[108,320]{1,0:T(8,128)}', space=vmem, size = 0x2a000, scoped, tag = 'scratch operand']
  #allocation7 [shape = 'f32[3,480,32]{2,1,0:T(8,128)}', space=vmem, size = 0xb4000, scoped, tag = 'scratch operand']
  #allocation8 [shape = 's32[2]{0}', space=sflag, size = 0x8, scoped, tag = 'scratch operand']
  #allocation9 [shape = 's32[]', space=sflag, size = 0x4, offset = 0, fixed_abs, tag = 'sflag constant byte address 0x0 - dummy sync flag']
  #allocation10 [shape = 's32[]', space=sflag, size = 0x4, offset = 0, fixed_abs, tag = 'sflag constant byte address 0x0 - dummy sync flag']
  %s0 = inlined_call_operand.vmem [shape: f32[2,8], index: 0, kind: input, shape index: {}]
  %s1 = inlined_call_operand.vmem [shape: f32[8,216], index: 1, kind: input, shape index: {}]
  %s2 = inlined_call_operand.vmem [shape: f32[1,216], index: 2, kind: input, shape index: {}]
  %s3 = inlined_call_operand.vmem [shape: f32[1,320], index: 3, kind: input, shape index: {}]
  %s4 = inlined_call_operand.vmem [shape: f32[3,1,32], index: 4, kind: input, shape index: {}]
  %s5 = inlined_call_operand.vmem [shape: f32[108,320], index: 5, kind: input, shape index: {}]
  %s6 = inlined_call_operand.vmem [shape: f32[3,480,32], index: 6, kind: input, shape index: {}]
  %s7 = inlined_call_operand.vmem [shape: f32[2,3,8,32], index: 7, kind: output, shape index: {}]
  %s8 = sld [smem:[#allocation0]]
  $region98: #{rn_forward.1} parent=0
    _
  %s10 = ssub.s32 1, %s8
  %s11 = scalar_select 0, %s10, %s8
  // Predicated region
  $region2: #{rn_forward.1} parent=0 // pred_check
    _
  $region3: #{rn_forward.1} parent=0 // pred_check_branch
    %13 = sbr.rel (0) target = $region5
  $region4: #{rn_forward.1} parent=0 // pred_region
    _
  $region5: #{rn_forward.1} parent=0 // pred_fallthru
    _
  // Predicated region
  $region6: #{rn_forward.1} parent=0 // pred_check
    _
  $region7: #{rn_forward.1} parent=0 // pred_check_branch
    %15 = sbr.rel (0) target = $region9
  $region8: #{rn_forward.1} parent=0 // pred_region
    _
  $region9: #{rn_forward.1} parent=0 // pred_fallthru
    _
  // Predicated region
  $region10: #{rn_forward.1} parent=0 // pred_check
    _
  $region11: #{rn_forward.1} parent=0 // pred_check_branch
    %17 = sbr.rel (0) target = $region13
  $region12: #{rn_forward.1} parent=0 // pred_region
    _
  $region13: #{rn_forward.1} parent=0 // pred_fallthru
    _
  // Predicated region
  $region14: #{rn_forward.1} parent=0 // pred_check
    _
  $region15: #{rn_forward.1} parent=0 // pred_check_branch
    %19 = sbr.rel (0) target = $region17
  $region16: #{rn_forward.1} parent=0 // pred_region
    _
  $region17: #{rn_forward.1} parent=0 // pred_fallthru
    _
  // Predicated region
  $region18: #{rn_forward.1} parent=0 // pred_check
    _
  $region19: #{rn_forward.1} parent=0 // pred_check_branch
    %21 = sbr.rel (0) target = $region21
  $region20: #{rn_forward.1} parent=0 // pred_region
    _
  $region21: #{rn_forward.1} parent=0 // pred_fallthru
    _
  %p23 = scmp.lt.u32.totalorder 336, 8
  %p24 = pneg %p23
  // Predicated region
  $region22: #{rn_forward.1} parent=0 // pred_check
    _
  $region23: #{rn_forward.1} parent=0 // pred_check_branch
    %26 = sbr.rel (%p23) target = $region25
  $region24: #{rn_forward.1} parent=0 // pred_region
    %s42 = sand.u32 336, 7
    %p43 = scmp.eq.s32.totalorder %s42, 0
    // Predicated region
    $region37: #{rn_forward.1} parent=24 // pred_check
      %p44 = pneg %p43
    $region38: #{rn_forward.1} parent=24 // pred_check_branch
      %46 = sbr.rel (%p44) target = $region40
    $region39: #{rn_forward.1} parent=24 // pred_region
      loop: start=0, step=1, limit=1
      $region41: #{rn_forward.1} parent=39 // loop_pre_header
        _
      $region42: #{rn_forward.1} parent=39 // loop_header
        %s48 = sphi 0, %s52
        %p49 = scmp.ge.s32.totalorder %s48, 1
        %s53 = sphi %s5, %s5
        %s54 = sphi [#allocation6], [#allocation6]
      $region43: #{rn_forward.1} parent=39 // loop_header_branch
        %51 = sbr.rel (%p49) target = $region47
      $region44: #{rn_forward.1} parent=39 // loop_body
        %v55 = vld [vmem:[%s53] sm:$0xff]
        %56 = vst [vmem:[%s54] sm:$0xff] %v55
        %v57 = vld [vmem:[%s53 + $0x8] sm:$0xff]
        %58 = vst [vmem:[%s54 + $0x8] sm:$0xff] %v57
        %v59 = vld [vmem:[%s53 + $0x10] sm:$0xff]
        %60 = vst [vmem:[%s54 + $0x10] sm:$0xff] %v59
        %v61 = vld [vmem:[%s53 + $0x18] sm:$0xff]
        %62 = vst [vmem:[%s54 + $0x18] sm:$0xff] %v61
        %v63 = vld [vmem:[%s53 + $0x20] sm:$0xff]
        %64 = vst [vmem:[%s54 + $0x20] sm:$0xff] %v63
        %v65 = vld [vmem:[%s53 + $0x28] sm:$0xff]
        %66 = vst [vmem:[%s54 + $0x28] sm:$0xff] %v65
        %v67 = vld [vmem:[%s53 + $0x30] sm:$0xff]
        %68 = vst [vmem:[%s54 + $0x30] sm:$0xff] %v67
        %v69 = vld [vmem:[%s53 + $0x38] sm:$0xff]
        %70 = vst [vmem:[%s54 + $0x38] sm:$0xff] %v69
        %v71 = vld [vmem:[%s53 + $0x40] sm:$0xff]
        %72 = vst [vmem:[%s54 + $0x40] sm:$0xff] %v71
        %v73 = vld [vmem:[%s53 + $0x48] sm:$0xff]
        %74 = vst [vmem:[%s54 + $0x48] sm:$0xff] %v73
        %v75 = vld [vmem:[%s53 + $0x50] sm:$0xff]
        %76 = vst [vmem:[%s54 + $0x50] sm:$0xff] %v75
        %v77 = vld [vmem:[%s53 + $0x58] sm:$0xff]
        %78 = vst [vmem:[%s54 + $0x58] sm:$0xff] %v77
        %v79 = vld [vmem:[%s53 + $0x60] sm:$0xff]
        %80 = vst [vmem:[%s54 + $0x60] sm:$0xff] %v79
        %v81 = vld [vmem:[%s53 + $0x68] sm:$0xff]
        %82 = vst [vmem:[%s54 + $0x68] sm:$0xff] %v81
        %v83 = vld [vmem:[%s53 + $0x70] sm:$0xff]
        %84 = vst [vmem:[%s54 + $0x70] sm:$0xff] %v83
        %v85 = vld [vmem:[%s53 + $0x78] sm:$0xff]
        %86 = vst [vmem:[%s54 + $0x78] sm:$0xff] %v85
        %v87 = vld [vmem:[%s53 + $0x80] sm:$0xff]
        %88 = vst [vmem:[%s54 + $0x80] sm:$0xff] %v87
        %v89 = vld [vmem:[%s53 + $0x88] sm:$0xff]
        %90 = vst [vmem:[%s54 + $0x88] sm:$0xff] %v89
        %v91 = vld [vmem:[%s53 + $0x90] sm:$0xff]
        %92 = vst [vmem:[%s54 + $0x90] sm:$0xff] %v91
        %v93 = vld [vmem:[%s53 + $0x98] sm:$0xff]
        %94 = vst [vmem:[%s54 + $0x98] sm:$0xff] %v93
        %v95 = vld [vmem:[%s53 + $0xa0] sm:$0xff]
        %96 = vst [vmem:[%s54 + $0xa0] sm:$0xff] %v95
        %v97 = vld [vmem:[%s53 + $0xa8] sm:$0xff]
        %98 = vst [vmem:[%s54 + $0xa8] sm:$0xff] %v97
        %v99 = vld [vmem:[%s53 + $0xb0] sm:$0xff]
        %100 = vst [vmem:[%s54 + $0xb0] sm:$0xff] %v99
        %v101 = vld [vmem:[%s53 + $0xb8] sm:$0xff]
        %102 = vst [vmem:[%s54 + $0xb8] sm:$0xff] %v101
        %v103 = vld [vmem:[%s53 + $0xc0] sm:$0xff]
        %104 = vst [vmem:[%s54 + $0xc0] sm:$0xff] %v103
        %v105 = vld [vmem:[%s53 + $0xc8] sm:$0xff]
        %106 = vst [vmem:[%s54 + $0xc8] sm:$0xff] %v105
        %v107 = vld [vmem:[%s53 + $0xd0] sm:$0xff]
        %108 = vst [vmem:[%s54 + $0xd0] sm:$0xff] %v107
        %v109 = vld [vmem:[%s53 + $0xd8] sm:$0xff]
        %110 = vst [vmem:[%s54 + $0xd8] sm:$0xff] %v109
        %v111 = vld [vmem:[%s53 + $0xe0] sm:$0xff]
        %112 = vst [vmem:[%s54 + $0xe0] sm:$0xff] %v111
        %v113 = vld [vmem:[%s53 + $0xe8] sm:$0xff]
        %114 = vst [vmem:[%s54 + $0xe8] sm:$0xff] %v113
        %v115 = vld [vmem:[%s53 + $0xf0] sm:$0xff]
        %116 = vst [vmem:[%s54 + $0xf0] sm:$0xff] %v115
        %v117 = vld [vmem:[%s53 + $0xf8] sm:$0xff]
        %118 = vst [vmem:[%s54 + $0xf8] sm:$0xff] %v117
        %v119 = vld [vmem:[%s53 + $0x100] sm:$0xff]
        %120 = vst [vmem:[%s54 + $0x100] sm:$0xff] %v119
        %v121 = vld [vmem:[%s53 + $0x108] sm:$0xff]
        %122 = vst [vmem:[%s54 + $0x108] sm:$0xff] %v121
        %v123 = vld [vmem:[%s53 + $0x110] sm:$0xff]
        %124 = vst [vmem:[%s54 + $0x110] sm:$0xff] %v123
        %v125 = vld [vmem:[%s53 + $0x118] sm:$0xff]
        %126 = vst [vmem:[%s54 + $0x118] sm:$0xff] %v125
        %v127 = vld [vmem:[%s53 + $0x120] sm:$0xff]
        %128 = vst [vmem:[%s54 + $0x120] sm:$0xff] %v127
        %v129 = vld [vmem:[%s53 + $0x128] sm:$0xff]
        %130 = vst [vmem:[%s54 + $0x128] sm:$0xff] %v129
        %v131 = vld [vmem:[%s53 + $0x130] sm:$0xff]
        %132 = vst [vmem:[%s54 + $0x130] sm:$0xff] %v131
        %v133 = vld [vmem:[%s53 + $0x138] sm:$0xff]
        %134 = vst [vmem:[%s54 + $0x138] sm:$0xff] %v133
        %v135 = vld [vmem:[%s53 + $0x140] sm:$0xff]
        %136 = vst [vmem:[%s54 + $0x140] sm:$0xff] %v135
        %v137 = vld [vmem:[%s53 + $0x148] sm:$0xff]
        %138 = vst [vmem:[%s54 + $0x148] sm:$0xff] %v137
      $region45: #{rn_forward.1} parent=39 // loop_footer
        %s52 = sadd.s32 1, %s48
      $region46: #{rn_forward.1} parent=39 // loop_footer_branch
        %47 = sbr.rel target = $region42
      $region47: #{rn_forward.1} parent=39 // loop_exit
        _
    $region40: #{rn_forward.1} parent=24 // pred_fallthru
      _
    %p139 = pneg %p43
    // Predicated region
    $region48: #{rn_forward.1} parent=24 // pred_check
      _
    $region49: #{rn_forward.1} parent=24 // pred_check_branch
      %141 = sbr.rel (%p43) target = $region51
    $region50: #{rn_forward.1} parent=24 // pred_region
      %s142 = sand.u32 336, 7
    $region51: #{rn_forward.1} parent=24 // pred_fallthru
      _
  $region25: #{rn_forward.1} parent=0 // pred_fallthru
    _
  // Predicated region
  $region26: #{rn_forward.1} parent=0 // pred_check
    %p27 = pneg %p23
  $region27: #{rn_forward.1} parent=0 // pred_check_branch
    %29 = sbr.rel (%p27) target = $region29
  $region28: #{rn_forward.1} parent=0 // pred_region
    %s30 = sshll.u32 1, 336
    %s31 = ssub.s32 %s30, 1
    loop: start=0, step=1, limit=1
    $region30: #{rn_forward.1} parent=28 // loop_pre_header
      _
    $region31: #{rn_forward.1} parent=28 // loop_header
      %s33 = sphi 0, %s37
      %p34 = scmp.ge.s32.totalorder %s33, 1
      %s38 = sphi %s5, %s5
      %s39 = sphi [#allocation6], [#allocation6]
    $region32: #{rn_forward.1} parent=28 // loop_header_branch
      %36 = sbr.rel (%p34) target = $region36
    $region33: #{rn_forward.1} parent=28 // loop_body
      %v40 = vld [vmem:[%s38] sm:%s31]
      %41 = vst [vmem:[%s39] sm:%s31] %v40
    $region34: #{rn_forward.1} parent=28 // loop_footer
      %s37 = sadd.s32 1, %s33
    $region35: #{rn_forward.1} parent=28 // loop_footer_branch
      %32 = sbr.rel target = $region31
    $region36: #{rn_forward.1} parent=28 // loop_exit
      _
  $region29: #{rn_forward.1} parent=0 // pred_fallthru
    _
  // Predicated region
  $region52: #{rn_forward.1} parent=0 // pred_check
    _
  $region53: #{rn_forward.1} parent=0 // pred_check_branch
    %145 = sbr.rel (0) target = $region55
  $region54: #{rn_forward.1} parent=0 // pred_region
    %146 = vsyncadd [#allocation8], 5376
  $region55: #{rn_forward.1} parent=0 // pred_fallthru
    _
  %s147 = scalar_lea.sflag [#allocation8], 1
  %p149 = scmp.lt.u32.totalorder 1440, 8
  %p150 = pneg %p149
  // Predicated region
  $region56: #{rn_forward.1} parent=0 // pred_check
    _
  $region57: #{rn_forward.1} parent=0 // pred_check_branch
    %152 = sbr.rel (%p149) target = $region59
  $region58: #{rn_forward.1} parent=0 // pred_region
    %s168 = sand.u32 1440, 7
    %p169 = scmp.eq.s32.totalorder %s168, 0
    // Predicated region
    $region71: #{rn_forward.1} parent=58 // pred_check
      %p170 = pneg %p169
    $region72: #{rn_forward.1} parent=58 // pred_check_branch
      %172 = sbr.rel (%p170) target = $region74
    $region73: #{rn_forward.1} parent=58 // pred_region
      loop: start=0, step=1, limit=1
      $region75: #{rn_forward.1} parent=73 // loop_pre_header
        _
      $region76: #{rn_forward.1} parent=73 // loop_header
        %s174 = sphi 0, %s178
        %p175 = scmp.ge.s32.totalorder %s174, 1
        %s179 = sphi %s6, %s6
        %s180 = sphi [#allocation7], [#allocation7]
      $region77: #{rn_forward.1} parent=73 // loop_header_branch
        %177 = sbr.rel (%p175) target = $region81
      $region78: #{rn_forward.1} parent=73 // loop_body
        %v181 = vld [vmem:[%s179] sm:$0xff]
        %182 = vst [vmem:[%s180] sm:$0xff] %v181
        %v183 = vld [vmem:[%s179 + $0x8] sm:$0xff]
        %184 = vst [vmem:[%s180 + $0x8] sm:$0xff] %v183
        %v185 = vld [vmem:[%s179 + $0x10] sm:$0xff]
        %186 = vst [vmem:[%s180 + $0x10] sm:$0xff] %v185
        %v187 = vld [vmem:[%s179 + $0x18] sm:$0xff]
        %188 = vst [vmem:[%s180 + $0x18] sm:$0xff] %v187
        %v189 = vld [vmem:[%s179 + $0x20] sm:$0xff]
        %190 = vst [vmem:[%s180 + $0x20] sm:$0xff] %v189
        %v191 = vld [vmem:[%s179 + $0x28] sm:$0xff]
        %192 = vst [vmem:[%s180 + $0x28] sm:$0xff] %v191
        %v193 = vld [vmem:[%s179 + $0x30] sm:$0xff]
        %194 = vst [vmem:[%s180 + $0x30] sm:$0xff] %v193
        %v195 = vld [vmem:[%s179 + $0x38] sm:$0xff]
        %196 = vst [vmem:[%s180 + $0x38] sm:$0xff] %v195
        %v197 = vld [vmem:[%s179 + $0x40] sm:$0xff]
        %198 = vst [vmem:[%s180 + $0x40] sm:$0xff] %v197
        %v199 = vld [vmem:[%s179 + $0x48] sm:$0xff]
        %200 = vst [vmem:[%s180 + $0x48] sm:$0xff] %v199
        %v201 = vld [vmem:[%s179 + $0x50] sm:$0xff]
        %202 = vst [vmem:[%s180 + $0x50] sm:$0xff] %v201
        %v203 = vld [vmem:[%s179 + $0x58] sm:$0xff]
        %204 = vst [vmem:[%s180 + $0x58] sm:$0xff] %v203
        %v205 = vld [vmem:[%s179 + $0x60] sm:$0xff]
        %206 = vst [vmem:[%s180 + $0x60] sm:$0xff] %v205
        %v207 = vld [vmem:[%s179 + $0x68] sm:$0xff]
        %208 = vst [vmem:[%s180 + $0x68] sm:$0xff] %v207
        %v209 = vld [vmem:[%s179 + $0x70] sm:$0xff]
        %210 = vst [vmem:[%s180 + $0x70] sm:$0xff] %v209
        %v211 = vld [vmem:[%s179 + $0x78] sm:$0xff]
        %212 = vst [vmem:[%s180 + $0x78] sm:$0xff] %v211
        %v213 = vld [vmem:[%s179 + $0x80] sm:$0xff]
        %214 = vst [vmem:[%s180 + $0x80] sm:$0xff] %v213
        %v215 = vld [vmem:[%s179 + $0x88] sm:$0xff]
        %216 = vst [vmem:[%s180 + $0x88] sm:$0xff] %v215
        %v217 = vld [vmem:[%s179 + $0x90] sm:$0xff]
        %218 = vst [vmem:[%s180 + $0x90] sm:$0xff] %v217
        %v219 = vld [vmem:[%s179 + $0x98] sm:$0xff]
        %220 = vst [vmem:[%s180 + $0x98] sm:$0xff] %v219
        %v221 = vld [vmem:[%s179 + $0xa0] sm:$0xff]
        %222 = vst [vmem:[%s180 + $0xa0] sm:$0xff] %v221
        %v223 = vld [vmem:[%s179 + $0xa8] sm:$0xff]
        %224 = vst [vmem:[%s180 + $0xa8] sm:$0xff] %v223
        %v225 = vld [vmem:[%s179 + $0xb0] sm:$0xff]
        %226 = vst [vmem:[%s180 + $0xb0] sm:$0xff] %v225
        %v227 = vld [vmem:[%s179 + $0xb8] sm:$0xff]
        %228 = vst [vmem:[%s180 + $0xb8] sm:$0xff] %v227
        %v229 = vld [vmem:[%s179 + $0xc0] sm:$0xff]
        %230 = vst [vmem:[%s180 + $0xc0] sm:$0xff] %v229
        %v231 = vld [vmem:[%s179 + $0xc8] sm:$0xff]
        %232 = vst [vmem:[%s180 + $0xc8] sm:$0xff] %v231
        %v233 = vld [vmem:[%s179 + $0xd0] sm:$0xff]
        %234 = vst [vmem:[%s180 + $0xd0] sm:$0xff] %v233
        %v235 = vld [vmem:[%s179 + $0xd8] sm:$0xff]
        %236 = vst [vmem:[%s180 + $0xd8] sm:$0xff] %v235
        %v237 = vld [vmem:[%s179 + $0xe0] sm:$0xff]
        %238 = vst [vmem:[%s180 + $0xe0] sm:$0xff] %v237
        %v239 = vld [vmem:[%s179 + $0xe8] sm:$0xff]
        %240 = vst [vmem:[%s180 + $0xe8] sm:$0xff] %v239
        %v241 = vld [vmem:[%s179 + $0xf0] sm:$0xff]
        %242 = vst [vmem:[%s180 + $0xf0] sm:$0xff] %v241
        %v243 = vld [vmem:[%s179 + $0xf8] sm:$0xff]
        %244 = vst [vmem:[%s180 + $0xf8] sm:$0xff] %v243
        %v245 = vld [vmem:[%s179 + $0x100] sm:$0xff]
        %246 = vst [vmem:[%s180 + $0x100] sm:$0xff] %v245
        %v247 = vld [vmem:[%s179 + $0x108] sm:$0xff]
        %248 = vst [vmem:[%s180 + $0x108] sm:$0xff] %v247
        %v249 = vld [vmem:[%s179 + $0x110] sm:$0xff]
        %250 = vst [vmem:[%s180 + $0x110] sm:$0xff] %v249
        %v251 = vld [vmem:[%s179 + $0x118] sm:$0xff]
        %252 = vst [vmem:[%s180 + $0x118] sm:$0xff] %v251
        %v253 = vld [vmem:[%s179 + $0x120] sm:$0xff]
        %254 = vst [vmem:[%s180 + $0x120] sm:$0xff] %v253
        %v255 = vld [vmem:[%s179 + $0x128] sm:$0xff]
        %256 = vst [vmem:[%s180 + $0x128] sm:$0xff] %v255
        %v257 = vld [vmem:[%s179 + $0x130] sm:$0xff]
        %258 = vst [vmem:[%s180 + $0x130] sm:$0xff] %v257
        %v259 = vld [vmem:[%s179 + $0x138] sm:$0xff]
        %260 = vst [vmem:[%s180 + $0x138] sm:$0xff] %v259
        %v261 = vld [vmem:[%s179 + $0x140] sm:$0xff]
        %262 = vst [vmem:[%s180 + $0x140] sm:$0xff] %v261
        %v263 = vld [vmem:[%s179 + $0x148] sm:$0xff]
        %264 = vst [vmem:[%s180 + $0x148] sm:$0xff] %v263
        %v265 = vld [vmem:[%s179 + $0x150] sm:$0xff]
        %266 = vst [vmem:[%s180 + $0x150] sm:$0xff] %v265
        %v267 = vld [vmem:[%s179 + $0x158] sm:$0xff]
        %268 = vst [vmem:[%s180 + $0x158] sm:$0xff] %v267
        %v269 = vld [vmem:[%s179 + $0x160] sm:$0xff]
        %270 = vst [vmem:[%s180 + $0x160] sm:$0xff] %v269
        %v271 = vld [vmem:[%s179 + $0x168] sm:$0xff]
        %272 = vst [vmem:[%s180 + $0x168] sm:$0xff] %v271
        %v273 = vld [vmem:[%s179 + $0x170] sm:$0xff]
        %274 = vst [vmem:[%s180 + $0x170] sm:$0xff] %v273
        %v275 = vld [vmem:[%s179 + $0x178] sm:$0xff]
        %276 = vst [vmem:[%s180 + $0x178] sm:$0xff] %v275
        %v277 = vld [vmem:[%s179 + $0x180] sm:$0xff]
        %278 = vst [vmem:[%s180 + $0x180] sm:$0xff] %v277
        %v279 = vld [vmem:[%s179 + $0x188] sm:$0xff]
        %280 = vst [vmem:[%s180 + $0x188] sm:$0xff] %v279
        %v281 = vld [vmem:[%s179 + $0x190] sm:$0xff]
        %282 = vst [vmem:[%s180 + $0x190] sm:$0xff] %v281
        %v283 = vld [vmem:[%s179 + $0x198] sm:$0xff]
        %284 = vst [vmem:[%s180 + $0x198] sm:$0xff] %v283
        %v285 = vld [vmem:[%s179 + $0x1a0] sm:$0xff]
        %286 = vst [vmem:[%s180 + $0x1a0] sm:$0xff] %v285
        %v287 = vld [vmem:[%s179 + $0x1a8] sm:$0xff]
        %288 = vst [vmem:[%s180 + $0x1a8] sm:$0xff] %v287
        %v289 = vld [vmem:[%s179 + $0x1b0] sm:$0xff]
        %290 = vst [vmem:[%s180 + $0x1b0] sm:$0xff] %v289
        %v291 = vld [vmem:[%s179 + $0x1b8] sm:$0xff]
        %292 = vst [vmem:[%s180 + $0x1b8] sm:$0xff] %v291
        %v293 = vld [vmem:[%s179 + $0x1c0] sm:$0xff]
        %294 = vst [vmem:[%s180 + $0x1c0] sm:$0xff] %v293
        %v295 = vld [vmem:[%s179 + $0x1c8] sm:$0xff]
        %296 = vst [vmem:[%s180 + $0x1c8] sm:$0xff] %v295
        %v297 = vld [vmem:[%s179 + $0x1d0] sm:$0xff]
        %298 = vst [vmem:[%s180 + $0x1d0] sm:$0xff] %v297
        %v299 = vld [vmem:[%s179 + $0x1d8] sm:$0xff]
        %300 = vst [vmem:[%s180 + $0x1d8] sm:$0xff] %v299
        %v301 = vld [vmem:[%s179 + $0x1e0] sm:$0xff]
        %302 = vst [vmem:[%s180 + $0x1e0] sm:$0xff] %v301
        %v303 = vld [vmem:[%s179 + $0x1e8] sm:$0xff]
        %304 = vst [vmem:[%s180 + $0x1e8] sm:$0xff] %v303
        %v305 = vld [vmem:[%s179 + $0x1f0] sm:$0xff]
        %306 = vst [vmem:[%s180 + $0x1f0] sm:$0xff] %v305
        %v307 = vld [vmem:[%s179 + $0x1f8] sm:$0xff]
        %308 = vst [vmem:[%s180 + $0x1f8] sm:$0xff] %v307
        %v309 = vld [vmem:[%s179 + $0x200] sm:$0xff]
        %310 = vst [vmem:[%s180 + $0x200] sm:$0xff] %v309
        %v311 = vld [vmem:[%s179 + $0x208] sm:$0xff]
        %312 = vst [vmem:[%s180 + $0x208] sm:$0xff] %v311
        %v313 = vld [vmem:[%s179 + $0x210] sm:$0xff]
        %314 = vst [vmem:[%s180 + $0x210] sm:$0xff] %v313
        %v315 = vld [vmem:[%s179 + $0x218] sm:$0xff]
        %316 = vst [vmem:[%s180 + $0x218] sm:$0xff] %v315
        %v317 = vld [vmem:[%s179 + $0x220] sm:$0xff]
        %318 = vst [vmem:[%s180 + $0x220] sm:$0xff] %v317
        %v319 = vld [vmem:[%s179 + $0x228] sm:$0xff]
        %320 = vst [vmem:[%s180 + $0x228] sm:$0xff] %v319
        %v321 = vld [vmem:[%s179 + $0x230] sm:$0xff]
        %322 = vst [vmem:[%s180 + $0x230] sm:$0xff] %v321
        %v323 = vld [vmem:[%s179 + $0x238] sm:$0xff]
        %324 = vst [vmem:[%s180 + $0x238] sm:$0xff] %v323
        %v325 = vld [vmem:[%s179 + $0x240] sm:$0xff]
        %326 = vst [vmem:[%s180 + $0x240] sm:$0xff] %v325
        %v327 = vld [vmem:[%s179 + $0x248] sm:$0xff]
        %328 = vst [vmem:[%s180 + $0x248] sm:$0xff] %v327
        %v329 = vld [vmem:[%s179 + $0x250] sm:$0xff]
        %330 = vst [vmem:[%s180 + $0x250] sm:$0xff] %v329
        %v331 = vld [vmem:[%s179 + $0x258] sm:$0xff]
        %332 = vst [vmem:[%s180 + $0x258] sm:$0xff] %v331
        %v333 = vld [vmem:[%s179 + $0x260] sm:$0xff]
        %334 = vst [vmem:[%s180 + $0x260] sm:$0xff] %v333
        %v335 = vld [vmem:[%s179 + $0x268] sm:$0xff]
        %336 = vst [vmem:[%s180 + $0x268] sm:$0xff] %v335
        %v337 = vld [vmem:[%s179 + $0x270] sm:$0xff]
        %338 = vst [vmem:[%s180 + $0x270] sm:$0xff] %v337
        %v339 = vld [vmem:[%s179 + $0x278] sm:$0xff]
        %340 = vst [vmem:[%s180 + $0x278] sm:$0xff] %v339
        %v341 = vld [vmem:[%s179 + $0x280] sm:$0xff]
        %342 = vst [vmem:[%s180 + $0x280] sm:$0xff] %v341
        %v343 = vld [vmem:[%s179 + $0x288] sm:$0xff]
        %344 = vst [vmem:[%s180 + $0x288] sm:$0xff] %v343
        %v345 = vld [vmem:[%s179 + $0x290] sm:$0xff]
        %346 = vst [vmem:[%s180 + $0x290] sm:$0xff] %v345
        %v347 = vld [vmem:[%s179 + $0x298] sm:$0xff]
        %348 = vst [vmem:[%s180 + $0x298] sm:$0xff] %v347
        %v349 = vld [vmem:[%s179 + $0x2a0] sm:$0xff]
        %350 = vst [vmem:[%s180 + $0x2a0] sm:$0xff] %v349
        %v351 = vld [vmem:[%s179 + $0x2a8] sm:$0xff]
        %352 = vst [vmem:[%s180 + $0x2a8] sm:$0xff] %v351
        %v353 = vld [vmem:[%s179 + $0x2b0] sm:$0xff]
        %354 = vst [vmem:[%s180 + $0x2b0] sm:$0xff] %v353
        %v355 = vld [vmem:[%s179 + $0x2b8] sm:$0xff]
        %356 = vst [vmem:[%s180 + $0x2b8] sm:$0xff] %v355
        %v357 = vld [vmem:[%s179 + $0x2c0] sm:$0xff]
        %358 = vst [vmem:[%s180 + $0x2c0] sm:$0xff] %v357
        %v359 = vld [vmem:[%s179 + $0x2c8] sm:$0xff]
        %360 = vst [vmem:[%s180 + $0x2c8] sm:$0xff] %v359
        %v361 = vld [vmem:[%s179 + $0x2d0] sm:$0xff]
        %362 = vst [vmem:[%s180 + $0x2d0] sm:$0xff] %v361
        %v363 = vld [vmem:[%s179 + $0x2d8] sm:$0xff]
        %364 = vst [vmem:[%s180 + $0x2d8] sm:$0xff] %v363
        %v365 = vld [vmem:[%s179 + $0x2e0] sm:$0xff]
        %366 = vst [vmem:[%s180 + $0x2e0] sm:$0xff] %v365
        %v367 = vld [vmem:[%s179 + $0x2e8] sm:$0xff]
        %368 = vst [vmem:[%s180 + $0x2e8] sm:$0xff] %v367
        %v369 = vld [vmem:[%s179 + $0x2f0] sm:$0xff]
        %370 = vst [vmem:[%s180 + $0x2f0] sm:$0xff] %v369
        %v371 = vld [vmem:[%s179 + $0x2f8] sm:$0xff]
        %372 = vst [vmem:[%s180 + $0x2f8] sm:$0xff] %v371
        %v373 = vld [vmem:[%s179 + $0x300] sm:$0xff]
        %374 = vst [vmem:[%s180 + $0x300] sm:$0xff] %v373
        %v375 = vld [vmem:[%s179 + $0x308] sm:$0xff]
        %376 = vst [vmem:[%s180 + $0x308] sm:$0xff] %v375
        %v377 = vld [vmem:[%s179 + $0x310] sm:$0xff]
        %378 = vst [vmem:[%s180 + $0x310] sm:$0xff] %v377
        %v379 = vld [vmem:[%s179 + $0x318] sm:$0xff]
        %380 = vst [vmem:[%s180 + $0x318] sm:$0xff] %v379
        %v381 = vld [vmem:[%s179 + $0x320] sm:$0xff]
        %382 = vst [vmem:[%s180 + $0x320] sm:$0xff] %v381
        %v383 = vld [vmem:[%s179 + $0x328] sm:$0xff]
        %384 = vst [vmem:[%s180 + $0x328] sm:$0xff] %v383
        %v385 = vld [vmem:[%s179 + $0x330] sm:$0xff]
        %386 = vst [vmem:[%s180 + $0x330] sm:$0xff] %v385
        %v387 = vld [vmem:[%s179 + $0x338] sm:$0xff]
        %388 = vst [vmem:[%s180 + $0x338] sm:$0xff] %v387
        %v389 = vld [vmem:[%s179 + $0x340] sm:$0xff]
        %390 = vst [vmem:[%s180 + $0x340] sm:$0xff] %v389
        %v391 = vld [vmem:[%s179 + $0x348] sm:$0xff]
        %392 = vst [vmem:[%s180 + $0x348] sm:$0xff] %v391
        %v393 = vld [vmem:[%s179 + $0x350] sm:$0xff]
        %394 = vst [vmem:[%s180 + $0x350] sm:$0xff] %v393
        %v395 = vld [vmem:[%s179 + $0x358] sm:$0xff]
        %396 = vst [vmem:[%s180 + $0x358] sm:$0xff] %v395
        %v397 = vld [vmem:[%s179 + $0x360] sm:$0xff]
        %398 = vst [vmem:[%s180 + $0x360] sm:$0xff] %v397
        %v399 = vld [vmem:[%s179 + $0x368] sm:$0xff]
        %400 = vst [vmem:[%s180 + $0x368] sm:$0xff] %v399
        %v401 = vld [vmem:[%s179 + $0x370] sm:$0xff]
        %402 = vst [vmem:[%s180 + $0x370] sm:$0xff] %v401
        %v403 = vld [vmem:[%s179 + $0x378] sm:$0xff]
        %404 = vst [vmem:[%s180 + $0x378] sm:$0xff] %v403
        %v405 = vld [vmem:[%s179 + $0x380] sm:$0xff]
        %406 = vst [vmem:[%s180 + $0x380] sm:$0xff] %v405
        %v407 = vld [vmem:[%s179 + $0x388] sm:$0xff]
        %408 = vst [vmem:[%s180 + $0x388] sm:$0xff] %v407
        %v409 = vld [vmem:[%s179 + $0x390] sm:$0xff]
        %410 = vst [vmem:[%s180 + $0x390] sm:$0xff] %v409
        %v411 = vld [vmem:[%s179 + $0x398] sm:$0xff]
        %412 = vst [vmem:[%s180 + $0x398] sm:$0xff] %v411
        %v413 = vld [vmem:[%s179 + $0x3a0] sm:$0xff]
        %414 = vst [vmem:[%s180 + $0x3a0] sm:$0xff] %v413
        %v415 = vld [vmem:[%s179 + $0x3a8] sm:$0xff]
        %416 = vst [vmem:[%s180 + $0x3a8] sm:$0xff] %v415
        %v417 = vld [vmem:[%s179 + $0x3b0] sm:$0xff]
        %418 = vst [vmem:[%s180 + $0x3b0] sm:$0xff] %v417
        %v419 = vld [vmem:[%s179 + $0x3b8] sm:$0xff]
        %420 = vst [vmem:[%s180 + $0x3b8] sm:$0xff] %v419
        %v421 = vld [vmem:[%s179 + $0x3c0] sm:$0xff]
        %422 = vst [vmem:[%s180 + $0x3c0] sm:$0xff] %v421
        %v423 = vld [vmem:[%s179 + $0x3c8] sm:$0xff]
        %424 = vst [vmem:[%s180 + $0x3c8] sm:$0xff] %v423
        %v425 = vld [vmem:[%s179 + $0x3d0] sm:$0xff]
        %426 = vst [vmem:[%s180 + $0x3d0] sm:$0xff] %v425
        %v427 = vld [vmem:[%s179 + $0x3d8] sm:$0xff]
        %428 = vst [vmem:[%s180 + $0x3d8] sm:$0xff] %v427
        %v429 = vld [vmem:[%s179 + $0x3e0] sm:$0xff]
        %430 = vst [vmem:[%s180 + $0x3e0] sm:$0xff] %v429
        %v431 = vld [vmem:[%s179 + $0x3e8] sm:$0xff]
        %432 = vst [vmem:[%s180 + $0x3e8] sm:$0xff] %v431
        %v433 = vld [vmem:[%s179 + $0x3f0] sm:$0xff]
        %434 = vst [vmem:[%s180 + $0x3f0] sm:$0xff] %v433
        %v435 = vld [vmem:[%s179 + $0x3f8] sm:$0xff]
        %436 = vst [vmem:[%s180 + $0x3f8] sm:$0xff] %v435
        %v437 = vld [vmem:[%s179 + $0x400] sm:$0xff]
        %438 = vst [vmem:[%s180 + $0x400] sm:$0xff] %v437
        %v439 = vld [vmem:[%s179 + $0x408] sm:$0xff]
        %440 = vst [vmem:[%s180 + $0x408] sm:$0xff] %v439
        %v441 = vld [vmem:[%s179 + $0x410] sm:$0xff]
        %442 = vst [vmem:[%s180 + $0x410] sm:$0xff] %v441
        %v443 = vld [vmem:[%s179 + $0x418] sm:$0xff]
        %444 = vst [vmem:[%s180 + $0x418] sm:$0xff] %v443
        %v445 = vld [vmem:[%s179 + $0x420] sm:$0xff]
        %446 = vst [vmem:[%s180 + $0x420] sm:$0xff] %v445
        %v447 = vld [vmem:[%s179 + $0x428] sm:$0xff]
        %448 = vst [vmem:[%s180 + $0x428] sm:$0xff] %v447
        %v449 = vld [vmem:[%s179 + $0x430] sm:$0xff]
        %450 = vst [vmem:[%s180 + $0x430] sm:$0xff] %v449
        %v451 = vld [vmem:[%s179 + $0x438] sm:$0xff]
        %452 = vst [vmem:[%s180 + $0x438] sm:$0xff] %v451
        %v453 = vld [vmem:[%s179 + $0x440] sm:$0xff]
        %454 = vst [vmem:[%s180 + $0x440] sm:$0xff] %v453
        %v455 = vld [vmem:[%s179 + $0x448] sm:$0xff]
        %456 = vst [vmem:[%s180 + $0x448] sm:$0xff] %v455
        %v457 = vld [vmem:[%s179 + $0x450] sm:$0xff]
        %458 = vst [vmem:[%s180 + $0x450] sm:$0xff] %v457
        %v459 = vld [vmem:[%s179 + $0x458] sm:$0xff]
        %460 = vst [vmem:[%s180 + $0x458] sm:$0xff] %v459
        %v461 = vld [vmem:[%s179 + $0x460] sm:$0xff]
        %462 = vst [vmem:[%s180 + $0x460] sm:$0xff] %v461
        %v463 = vld [vmem:[%s179 + $0x468] sm:$0xff]
        %464 = vst [vmem:[%s180 + $0x468] sm:$0xff] %v463
        %v465 = vld [vmem:[%s179 + $0x470] sm:$0xff]
        %466 = vst [vmem:[%s180 + $0x470] sm:$0xff] %v465
        %v467 = vld [vmem:[%s179 + $0x478] sm:$0xff]
        %468 = vst [vmem:[%s180 + $0x478] sm:$0xff] %v467
        %v469 = vld [vmem:[%s179 + $0x480] sm:$0xff]
        %470 = vst [vmem:[%s180 + $0x480] sm:$0xff] %v469
        %v471 = vld [vmem:[%s179 + $0x488] sm:$0xff]
        %472 = vst [vmem:[%s180 + $0x488] sm:$0xff] %v471
        %v473 = vld [vmem:[%s179 + $0x490] sm:$0xff]
        %474 = vst [vmem:[%s180 + $0x490] sm:$0xff] %v473
        %v475 = vld [vmem:[%s179 + $0x498] sm:$0xff]
        %476 = vst [vmem:[%s180 + $0x498] sm:$0xff] %v475
        %v477 = vld [vmem:[%s179 + $0x4a0] sm:$0xff]
        %478 = vst [vmem:[%s180 + $0x4a0] sm:$0xff] %v477
        %v479 = vld [vmem:[%s179 + $0x4a8] sm:$0xff]
        %480 = vst [vmem:[%s180 + $0x4a8] sm:$0xff] %v479
        %v481 = vld [vmem:[%s179 + $0x4b0] sm:$0xff]
        %482 = vst [vmem:[%s180 + $0x4b0] sm:$0xff] %v481
        %v483 = vld [vmem:[%s179 + $0x4b8] sm:$0xff]
        %484 = vst [vmem:[%s180 + $0x4b8] sm:$0xff] %v483
        %v485 = vld [vmem:[%s179 + $0x4c0] sm:$0xff]
        %486 = vst [vmem:[%s180 + $0x4c0] sm:$0xff] %v485
        %v487 = vld [vmem:[%s179 + $0x4c8] sm:$0xff]
        %488 = vst [vmem:[%s180 + $0x4c8] sm:$0xff] %v487
        %v489 = vld [vmem:[%s179 + $0x4d0] sm:$0xff]
        %490 = vst [vmem:[%s180 + $0x4d0] sm:$0xff] %v489
        %v491 = vld [vmem:[%s179 + $0x4d8] sm:$0xff]
        %492 = vst [vmem:[%s180 + $0x4d8] sm:$0xff] %v491
        %v493 = vld [vmem:[%s179 + $0x4e0] sm:$0xff]
        %494 = vst [vmem:[%s180 + $0x4e0] sm:$0xff] %v493
        %v495 = vld [vmem:[%s179 + $0x4e8] sm:$0xff]
        %496 = vst [vmem:[%s180 + $0x4e8] sm:$0xff] %v495
        %v497 = vld [vmem:[%s179 + $0x4f0] sm:$0xff]
        %498 = vst [vmem:[%s180 + $0x4f0] sm:$0xff] %v497
        %v499 = vld [vmem:[%s179 + $0x4f8] sm:$0xff]
        %500 = vst [vmem:[%s180 + $0x4f8] sm:$0xff] %v499
        %v501 = vld [vmem:[%s179 + $0x500] sm:$0xff]
        %502 = vst [vmem:[%s180 + $0x500] sm:$0xff] %v501
        %v503 = vld [vmem:[%s179 + $0x508] sm:$0xff]
        %504 = vst [vmem:[%s180 + $0x508] sm:$0xff] %v503
        %v505 = vld [vmem:[%s179 + $0x510] sm:$0xff]
        %506 = vst [vmem:[%s180 + $0x510] sm:$0xff] %v505
        %v507 = vld [vmem:[%s179 + $0x518] sm:$0xff]
        %508 = vst [vmem:[%s180 + $0x518] sm:$0xff] %v507
        %v509 = vld [vmem:[%s179 + $0x520] sm:$0xff]
        %510 = vst [vmem:[%s180 + $0x520] sm:$0xff] %v509
        %v511 = vld [vmem:[%s179 + $0x528] sm:$0xff]
        %512 = vst [vmem:[%s180 + $0x528] sm:$0xff] %v511
        %v513 = vld [vmem:[%s179 + $0x530] sm:$0xff]
        %514 = vst [vmem:[%s180 + $0x530] sm:$0xff] %v513
        %v515 = vld [vmem:[%s179 + $0x538] sm:$0xff]
        %516 = vst [vmem:[%s180 + $0x538] sm:$0xff] %v515
        %v517 = vld [vmem:[%s179 + $0x540] sm:$0xff]
        %518 = vst [vmem:[%s180 + $0x540] sm:$0xff] %v517
        %v519 = vld [vmem:[%s179 + $0x548] sm:$0xff]
        %520 = vst [vmem:[%s180 + $0x548] sm:$0xff] %v519
        %v521 = vld [vmem:[%s179 + $0x550] sm:$0xff]
        %522 = vst [vmem:[%s180 + $0x550] sm:$0xff] %v521
        %v523 = vld [vmem:[%s179 + $0x558] sm:$0xff]
        %524 = vst [vmem:[%s180 + $0x558] sm:$0xff] %v523
        %v525 = vld [vmem:[%s179 + $0x560] sm:$0xff]
        %526 = vst [vmem:[%s180 + $0x560] sm:$0xff] %v525
        %v527 = vld [vmem:[%s179 + $0x568] sm:$0xff]
        %528 = vst [vmem:[%s180 + $0x568] sm:$0xff] %v527
        %v529 = vld [vmem:[%s179 + $0x570] sm:$0xff]
        %530 = vst [vmem:[%s180 + $0x570] sm:$0xff] %v529
        %v531 = vld [vmem:[%s179 + $0x578] sm:$0xff]
        %532 = vst [vmem:[%s180 + $0x578] sm:$0xff] %v531
        %v533 = vld [vmem:[%s179 + $0x580] sm:$0xff]
        %534 = vst [vmem:[%s180 + $0x580] sm:$0xff] %v533
        %v535 = vld [vmem:[%s179 + $0x588] sm:$0xff]
        %536 = vst [vmem:[%s180 + $0x588] sm:$0xff] %v535
        %v537 = vld [vmem:[%s179 + $0x590] sm:$0xff]
        %538 = vst [vmem:[%s180 + $0x590] sm:$0xff] %v537
        %v539 = vld [vmem:[%s179 + $0x598] sm:$0xff]
        %540 = vst [vmem:[%s180 + $0x598] sm:$0xff] %v539
      $region79: #{rn_forward.1} parent=73 // loop_footer
        %s178 = sadd.s32 1, %s174
      $region80: #{rn_forward.1} parent=73 // loop_footer_branch
        %173 = sbr.rel target = $region76
      $region81: #{rn_forward.1} parent=73 // loop_exit
        _
    $region74: #{rn_forward.1} parent=58 // pred_fallthru
      _
    %p541 = pneg %p169
    // Predicated region
    $region82: #{rn_forward.1} parent=58 // pred_check
      _
    $region83: #{rn_forward.1} parent=58 // pred_check_branch
      %543 = sbr.rel (%p169) target = $region85
    $region84: #{rn_forward.1} parent=58 // pred_region
      %s544 = sand.u32 1440, 7
    $region85: #{rn_forward.1} parent=58 // pred_fallthru
      _
  $region59: #{rn_forward.1} parent=0 // pred_fallthru
    _
  // Predicated region
  $region60: #{rn_forward.1} parent=0 // pred_check
    %p153 = pneg %p149
  $region61: #{rn_forward.1} parent=0 // pred_check_branch
    %155 = sbr.rel (%p153) target = $region63
  $region62: #{rn_forward.1} parent=0 // pred_region
    %s156 = sshll.u32 1, 1440
    %s157 = ssub.s32 %s156, 1
    loop: start=0, step=1, limit=1
    $region64: #{rn_forward.1} parent=62 // loop_pre_header
      _
    $region65: #{rn_forward.1} parent=62 // loop_header
      %s159 = sphi 0, %s163
      %p160 = scmp.ge.s32.totalorder %s159, 1
      %s164 = sphi %s6, %s6
      %s165 = sphi [#allocation7], [#allocation7]
    $region66: #{rn_forward.1} parent=62 // loop_header_branch
      %162 = sbr.rel (%p160) target = $region70
    $region67: #{rn_forward.1} parent=62 // loop_body
      %v166 = vld [vmem:[%s164] sm:%s157]
      %167 = vst [vmem:[%s165] sm:%s157] %v166
    $region68: #{rn_forward.1} parent=62 // loop_footer
      %s163 = sadd.s32 1, %s159
    $region69: #{rn_forward.1} parent=62 // loop_footer_branch
      %158 = sbr.rel target = $region65
    $region70: #{rn_forward.1} parent=62 // loop_exit
      _
  $region63: #{rn_forward.1} parent=0 // pred_fallthru
    _
  // Predicated region
  $region86: #{rn_forward.1} parent=0 // pred_check
    _
  $region87: #{rn_forward.1} parent=0 // pred_check_branch
    %547 = sbr.rel (0) target = $region89
  $region88: #{rn_forward.1} parent=0 // pred_region
    %548 = vsyncadd %s147, 23040
  $region89: #{rn_forward.1} parent=0 // pred_fallthru
    _
  %v549 = vld [vmem:[%s0] sm:$0x3]
  %v550 = vld [vmem:[%s1] sm:$0xff]
  %v551 = vld [vmem:[%s1 + $0x8] sm:$0xff]
  %v552 = vld [vmem:[%s2] sm:$0x3]
  %v554 = vlaneseq
  %v555 = vshrl.u32 %v554, 7
  %v556 = vsub.s32 0, %v555
  %v557 = vrot.slane %v552, %v556
  %v558 = vlaneseq
  %v559 = vshrl.u32 %v558, 7
  %v560 = vsub.s32 1, %v559
  %v561 = vrot.slane %v552, %v560
  %vm564 = vcmask 64512
  %v566 = vsel %vm564, %v549, 0
  %568 = vmatprep.subr.mxu0 0.0
  %569 = vmatpush1.msra.mxu0 0.0
  %570 = vmatprep.subr.mxu0 0.0
  %571 = vmatpush1.msra.mxu0 0.0
  %572 = vmatprep.subr.mxu0 0.0
  %573 = vmatpush1.msra.mxu0 0.0
  %574 = vmatprep.subr.mxu0 0.0
  %575 = vmatpush1.msra.mxu0 0.0
  %576 = vmatprep.subr.mxu0 0.0
  %577 = vmatpush1.msra.mxu0 0.0
  %578 = vmatprep.subr.mxu0 0.0
  %579 = vmatpush1.msra.mxu0 0.0
  %580 = vmatprep.subr.mxu0 0.0
  %581 = vmatpush1.msra.mxu0 0.0
  %582 = vmatprep.subr.mxu0 0.0
  %583 = vmatpush1.msra.mxu0 0.0
  %584 = vmatprep.subr.mxu0 0.0
  %585 = vmatpush1.msra.mxu0 0.0
  %586 = vmatprep.subr.mxu0 0.0
  %587 = vmatpush1.msra.mxu0 0.0
  %588 = vmatprep.subr.mxu0 0.0
  %589 = vmatpush1.msra.mxu0 0.0
  %590 = vmatprep.subr.mxu0 0.0
  %591 = vmatpush1.msra.mxu0 0.0
  %592 = vmatprep.subr.mxu0 0.0
  %593 = vmatpush1.msra.mxu0 0.0
  %594 = vmatprep.subr.mxu0 0.0
  %595 = vmatpush1.msra.mxu0 0.0
  %596 = vmatprep.subr.mxu0 0.0
  %597 = vmatpush1.msra.mxu0 0.0
  %598 = vmatprep.subr.mxu0 %v551
  %599 = vmatpush1.msra.mxu0 %v550
  %600 = vmatprep.subr.mxu0 0.0
  %601 = vmatpush2.msra.mxu0 0.0
  %602 = vmatprep.subr.mxu0 0.0
  %603 = vmatpush2.msra.mxu0 0.0
  %604 = vmatprep.subr.mxu0 0.0
  %605 = vmatpush2.msra.mxu0 0.0
  %606 = vmatprep.subr.mxu0 0.0
  %607 = vmatpush2.msra.mxu0 0.0
  %608 = vmatprep.subr.mxu0 0.0
  %609 = vmatpush2.msra.mxu0 0.0
  %610 = vmatprep.subr.mxu0 0.0
  %611 = vmatpush2.msra.mxu0 0.0
  %612 = vmatprep.subr.mxu0 0.0
  %613 = vmatpush2.msra.mxu0 0.0
  %614 = vmatprep.subr.mxu0 0.0
  %615 = vmatpush2.msra.mxu0 0.0
  %616 = vmatprep.subr.mxu0 0.0
  %617 = vmatpush2.msra.mxu0 0.0
  %618 = vmatprep.subr.mxu0 0.0
  %619 = vmatpush2.msra.mxu0 0.0
  %620 = vmatprep.subr.mxu0 0.0
  %621 = vmatpush2.msra.mxu0 0.0
  %622 = vmatprep.subr.mxu0 0.0
  %623 = vmatpush2.msra.mxu0 0.0
  %624 = vmatprep.subr.mxu0 0.0
  %625 = vmatpush2.msra.mxu0 0.0
  %626 = vmatprep.subr.mxu0 0.0
  %627 = vmatpush2.msra.mxu0 0.0
  %628 = vmatprep.subr.mxu0 0.0
  %629 = vmatpush2.msra.mxu0 0.0
  %630 = vmatprep.subr.mxu0 0.0
  %631 = vmatpush2.msra.mxu0 0.0
  %632 = vmatprep.mubr.f32.mxu0 0.0
  %633 = vmatmul.mubr.f32.gmra.mxu0 %v566
  %v634 = vpop.f32.mrf.mxu0
  %v635 = vadd.f32 %v557, %v634
  %v636 = vpop.f32.mrf.mxu0
  %v637 = vadd.f32 %v561, %v636
  %638 = vdwg.mxu0
  %v639 = vmax.f32 %v635, 0.0
  %v640 = vmax.f32 %v637, 0.0
  %v643 = vcombine.low %v639, %v640
  %v645 = vunpack.c.l.s4 1983009808
  %v646 = vunpack.c.0.s8 %v645
  %v647 = vlaneseq
  %v648 = vshrl.u32 %v647, 7
  %v649 = vsub.s32 %v646, %v648
  %v650 = vrot.slane %v643, %v649
  %vm652 = vcmask 1041408
  %vm653 = vcmask 715778
  %vm654 = vmor %vm653, %vm652
  %655 = vst.msk [vmem:[#allocation2] sm:$0xf] %vm654, %v650
  %v656 = vld [vmem:[#allocation2] sm:$0x3]
  %v659 = vunpack.c.l.s4 1966171168
  %v660 = vunpack.c.0.s8 %v659
  %v661 = vlaneseq
  %v662 = vshrl.u32 %v661, 7
  %v663 = vsub.s32 %v660, %v662
  %v664 = vrot.slane %v656, %v663
  %v665 = vcombine.high %v664, %v664
  %vm668 = vcmask 876544
  %669 = vst.msk [vmem:[#allocation3] sm:$0x1] %vm668, %v664
  %670 = vst.msk [vmem:[#allocation3 + $0x4] sm:$0x1] %vm668, %v665
  %v671 = vld [vmem:[#allocation2] sm:$0xf]
  %v674 = vunpack.c.l.s4 1966171168
  %v675 = vunpack.c.0.s8 %v674
  %v676 = vlaneseq
  %v677 = vshrl.u32 %v676, 7
  %v678 = vsub.s32 %v675, %v677
  %v679 = vrot.slane %v671, %v678
  %v680 = vcombine.high %v679, %v679
  %v681 = vlaneseq
  %v682 = vshrl.u32 %v681, 7
  %v683 = vsub.s32 0, %v682
  %v684 = vrot.slane %v679, %v683
  %v685 = vlaneseq
  %v686 = vshrl.u32 %v685, 7
  %v687 = vsub.s32 1, %v686
  %v688 = vrot.slane %v679, %v687
  %v689 = vlaneseq
  %v690 = vshrl.u32 %v689, 7
  %v691 = vsub.s32 0, %v690
  %v692 = vrot.slane %v680, %v691
  %v693 = vlaneseq
  %v694 = vshrl.u32 %v693, 7
  %v695 = vsub.s32 1, %v694
  %v696 = vrot.slane %v680, %v695
  %697 = vrot.lane.b32.xlu0 %v684, 92
  %v698 = vpop.permute.xlu0 %697
  %699 = vrot.lane.b32.xlu0 %v688, 92
  %v700 = vpop.permute.xlu0 %699
  %701 = vrot.lane.b32.xlu0 %v692, 92
  %v702 = vpop.permute.xlu0 %701
  %703 = vrot.lane.b32.xlu0 %v696, 92
  %v704 = vpop.permute.xlu0 %703
  %vm705 = vcmask 752640
  %v706 = vsel %vm705, %v698, %v700
  %v707 = vsel %vm705, %v702, %v704
  %710 = vst.msk [vmem:[#allocation3 + $0x1] sm:$0x1] %vm668, %v706
  %711 = vst.msk [vmem:[#allocation3 + $0x5] sm:$0x1] %vm668, %v707
  %v712 = vld [vmem:[#allocation2] sm:$0xf]
  %v715 = vunpack.c.l.s4 1966171168
  %v716 = vunpack.c.0.s8 %v715
  %v717 = vlaneseq
  %v718 = vshrl.u32 %v717, 7
  %v719 = vsub.s32 %v716, %v718
  %v720 = vrot.slane %v712, %v719
  %v721 = vcombine.high %v720, %v720
  %v722 = vlaneseq
  %v723 = vshrl.u32 %v722, 7
  %v724 = vsub.s32 0, %v723
  %v725 = vrot.slane %v720, %v724
  %v726 = vlaneseq
  %v727 = vshrl.u32 %v726, 7
  %v728 = vsub.s32 1, %v727
  %v729 = vrot.slane %v720, %v728
  %v730 = vlaneseq
  %v731 = vshrl.u32 %v730, 7
  %v732 = vsub.s32 0, %v731
  %v733 = vrot.slane %v721, %v732
  %v734 = vlaneseq
  %v735 = vshrl.u32 %v734, 7
  %v736 = vsub.s32 1, %v735
  %v737 = vrot.slane %v721, %v736
  %738 = vrot.lane.b32.xlu0 %v725, 56
  %v739 = vpop.permute.xlu0 %738
  %740 = vrot.lane.b32.xlu0 %v729, 56
  %v741 = vpop.permute.xlu0 %740
  %742 = vrot.lane.b32.xlu0 %v733, 56
  %v743 = vpop.permute.xlu0 %742
  %744 = vrot.lane.b32.xlu0 %v737, 56
  %v745 = vpop.permute.xlu0 %744
  %vm746 = vcmask 457728
  %v747 = vsel %vm746, %v739, %v741
  %v748 = vsel %vm746, %v743, %v745
  %751 = vst.msk [vmem:[#allocation3 + $0x2] sm:$0x1] %vm668, %v747
  %752 = vst.msk [vmem:[#allocation3 + $0x6] sm:$0x1] %vm668, %v748
  %v753 = vld [vmem:[#allocation2] sm:$0xf]
  %v756 = vunpack.c.l.s4 1966171168
  %v757 = vunpack.c.0.s8 %v756
  %v758 = vlaneseq
  %v759 = vshrl.u32 %v758, 7
  %v760 = vsub.s32 %v757, %v759
  %v761 = vrot.slane %v753, %v760
  %v762 = vcombine.high %v761, %v761
  %v763 = vlaneseq
  %v764 = vshrl.u32 %v763, 7
  %v765 = vsub.s32 0, %v764
  %v766 = vrot.slane %v761, %v765
  %v767 = vlaneseq
  %v768 = vshrl.u32 %v767, 7
  %v769 = vsub.s32 1, %v768
  %v770 = vrot.slane %v761, %v769
  %v771 = vlaneseq
  %v772 = vshrl.u32 %v771, 7
  %v773 = vsub.s32 0, %v772
  %v774 = vrot.slane %v762, %v773
  %v775 = vlaneseq
  %v776 = vshrl.u32 %v775, 7
  %v777 = vsub.s32 1, %v776
  %v778 = vrot.slane %v762, %v777
  %779 = vrot.lane.b32.xlu0 %v766, 20
  %v780 = vpop.permute.xlu0 %779
  %781 = vrot.lane.b32.xlu0 %v770, 20
  %v782 = vpop.permute.xlu0 %781
  %783 = vrot.lane.b32.xlu0 %v774, 20
  %v784 = vpop.permute.xlu0 %783
  %785 = vrot.lane.b32.xlu0 %v778, 20
  %v786 = vpop.permute.xlu0 %785
  %vm787 = vcmask 162816
  %v788 = vsel %vm787, %v780, %v782
  %v789 = vsel %vm787, %v784, %v786
  %792 = vst.msk [vmem:[#allocation3 + $0x3] sm:$0x1] %vm668, %v788
  %793 = vst.msk [vmem:[#allocation3 + $0x7] sm:$0x1] %vm668, %v789
  %v794 = vld [vmem:[#allocation3] sm:$0xf]
  %v795 = vld [vmem:[#allocation3 + $0x4] sm:$0xf]
  %s796 = smul.u32 8, 14
  %s797 = smul.u32 %s796, 3
  %s798 = sshll.u32 %s797, 4
  %799 = dma.done [#allocation8], %s798
  %v800 = vld [vmem:[#allocation6] sm:$0xff]
  %v801 = vld [vmem:[#allocation6 + $0x8] sm:$0xff]
  %v802 = vld [vmem:[#allocation6 + $0x10] sm:$0xff]
  %v803 = vld [vmem:[#allocation6 + $0x18] sm:$0xff]
  %v804 = vld [vmem:[#allocation6 + $0x20] sm:$0xff]
  %v805 = vld [vmem:[#allocation6 + $0x28] sm:$0xff]
  %v806 = vld [vmem:[#allocation6 + $0x30] sm:$0xff]
  %v807 = vld [vmem:[#allocation6 + $0x38] sm:$0xff]
  %v808 = vld [vmem:[#allocation6 + $0x40] sm:$0xff]
  %v809 = vld [vmem:[#allocation6 + $0x48] sm:$0xff]
  %v810 = vld [vmem:[#allocation6 + $0x50] sm:$0xff]
  %v811 = vld [vmem:[#allocation6 + $0x58] sm:$0xff]
  %v812 = vld [vmem:[#allocation6 + $0x60] sm:$0xff]
  %v813 = vld [vmem:[#allocation6 + $0x68] sm:$0xff]
  %v814 = vld [vmem:[#allocation6 + $0x70] sm:$0xff]
  %v815 = vld [vmem:[#allocation6 + $0x78] sm:$0xff]
  %v816 = vld [vmem:[#allocation6 + $0x80] sm:$0xff]
  %v817 = vld [vmem:[#allocation6 + $0x88] sm:$0xff]
  %v818 = vld [vmem:[#allocation6 + $0x90] sm:$0xff]
  %v819 = vld [vmem:[#allocation6 + $0x98] sm:$0xff]
  %v820 = vld [vmem:[#allocation6 + $0xa0] sm:$0xff]
  %v821 = vld [vmem:[#allocation6 + $0xa8] sm:$0xff]
  %v822 = vld [vmem:[#allocation6 + $0xb0] sm:$0xff]
  %v823 = vld [vmem:[#allocation6 + $0xb8] sm:$0xff]
  %v824 = vld [vmem:[#allocation6 + $0xc0] sm:$0xff]
  %v825 = vld [vmem:[#allocation6 + $0xc8] sm:$0xff]
  %v826 = vld [vmem:[#allocation6 + $0xd0] sm:$0xff]
  %v827 = vld [vmem:[#allocation6 + $0xd8] sm:$0xff]
  %v828 = vld [vmem:[#allocation6 + $0xe0] sm:$0xff]
  %v829 = vld [vmem:[#allocation6 + $0xe8] sm:$0xff]
  %v830 = vld [vmem:[#allocation6 + $0xf0] sm:$0xff]
  %v831 = vld [vmem:[#allocation6 + $0xf8] sm:$0xff]
  %v832 = vld [vmem:[#allocation6 + $0x100] sm:$0xff]
  %v833 = vld [vmem:[#allocation6 + $0x108] sm:$0xff]
  %v834 = vld [vmem:[#allocation6 + $0x110] sm:$0xff]
  %v835 = vld [vmem:[#allocation6 + $0x118] sm:$0xff]
  %v836 = vld [vmem:[#allocation6 + $0x120] sm:$0xff]
  %v837 = vld [vmem:[#allocation6 + $0x128] sm:$0xff]
  %v838 = vld [vmem:[#allocation6 + $0x130] sm:$0xff]
  %v839 = vld [vmem:[#allocation6 + $0x138] sm:$0xf]
  %v840 = vld [vmem:[#allocation6 + $0x140] sm:$0xf]
  %v841 = vld [vmem:[#allocation6 + $0x148] sm:$0xf]
  %v842 = vld [vmem:[%s3] sm:$0x7]
  %v844 = vlaneseq
  %v845 = vshrl.u32 %v844, 7
  %v846 = vsub.s32 0, %v845
  %v847 = vrot.slane %v842, %v846
  %v848 = vlaneseq
  %v849 = vshrl.u32 %v848, 7
  %v850 = vsub.s32 1, %v849
  %v851 = vrot.slane %v842, %v850
  %v852 = vlaneseq
  %v853 = vshrl.u32 %v852, 7
  %v854 = vsub.s32 2, %v853
  %v855 = vrot.slane %v842, %v854
  %v861 = vcombine.low %v794, %v795
  %vm862 = vcmask 883712
  %v863 = vsel %vm862, %v861, 0
  %vm865 = vcmask 1043456
  %v867 = vsel %vm865, %v839, 0
  %v870 = vsel %vm865, %v840, 0
  %v873 = vsel %vm865, %v841, 0
  %875 = vmatprep.subr.mxu0 0.0
  %876 = vmatpush1.msra.mxu0 0.0
  %877 = vmatprep.subr.mxu0 0.0
  %878 = vmatpush1.msra.mxu0 0.0
  %879 = vmatprep.subr.mxu0 %v870
  %880 = vmatpush1.msra.mxu0 %v867
  %881 = vmatprep.subr.mxu0 %v837
  %882 = vmatpush1.msra.mxu0 %v836
  %883 = vmatprep.subr.mxu0 %v834
  %884 = vmatpush1.msra.mxu0 %v833
  %885 = vmatprep.subr.mxu0 %v831
  %886 = vmatpush1.msra.mxu0 %v830
  %887 = vmatprep.subr.mxu0 %v828
  %888 = vmatpush1.msra.mxu0 %v827
  %889 = vmatprep.subr.mxu0 %v825
  %890 = vmatpush1.msra.mxu0 %v824
  %891 = vmatprep.subr.mxu0 %v822
  %892 = vmatpush1.msra.mxu0 %v821
  %893 = vmatprep.subr.mxu0 %v819
  %894 = vmatpush1.msra.mxu0 %v818
  %895 = vmatprep.subr.mxu0 %v816
  %896 = vmatpush1.msra.mxu0 %v815
  %897 = vmatprep.subr.mxu0 %v813
  %898 = vmatpush1.msra.mxu0 %v812
  %899 = vmatprep.subr.mxu0 %v810
  %900 = vmatpush1.msra.mxu0 %v809
  %901 = vmatprep.subr.mxu0 %v807
  %902 = vmatpush1.msra.mxu0 %v806
  %903 = vmatprep.subr.mxu0 %v804
  %904 = vmatpush1.msra.mxu0 %v803
  %905 = vmatprep.subr.mxu0 %v801
  %906 = vmatpush1.msra.mxu0 %v800
  %907 = vmatprep.subr.mxu0 0.0
  %908 = vmatpush2.msra.mxu0 0.0
  %909 = vmatprep.subr.mxu0 0.0
  %910 = vmatpush2.msra.mxu0 0.0
  %911 = vmatprep.subr.mxu0 0.0
  %912 = vmatpush2.msra.mxu0 0.0
  %913 = vmatprep.subr.mxu0 0.0
  %914 = vmatpush2.msra.mxu0 0.0
  %915 = vmatprep.subr.mxu0 0.0
  %916 = vmatpush2.msra.mxu0 0.0
  %917 = vmatprep.subr.mxu0 0.0
  %918 = vmatpush2.msra.mxu0 0.0
  %919 = vmatprep.subr.mxu0 0.0
  %920 = vmatpush2.msra.mxu0 0.0
  %921 = vmatprep.subr.mxu0 0.0
  %922 = vmatpush2.msra.mxu0 0.0
  %923 = vmatprep.subr.mxu0 0.0
  %924 = vmatpush2.msra.mxu0 0.0
  %925 = vmatprep.subr.mxu0 0.0
  %926 = vmatpush2.msra.mxu0 0.0
  %927 = vmatprep.subr.mxu0 0.0
  %928 = vmatpush2.msra.mxu0 0.0
  %929 = vmatprep.subr.mxu0 0.0
  %930 = vmatpush2.msra.mxu0 0.0
  %931 = vmatprep.subr.mxu0 0.0
  %932 = vmatpush2.msra.mxu0 0.0
  %933 = vmatprep.subr.mxu0 0.0
  %934 = vmatpush2.msra.mxu0 0.0
  %935 = vmatprep.subr.mxu0 0.0
  %936 = vmatpush2.msra.mxu0 0.0
  %937 = vmatprep.subr.mxu0 0.0
  %938 = vmatpush2.msra.mxu0 0.0
  %939 = vmatprep.mubr.f32.mxu0 0.0
  %940 = vmatmul.mubr.f32.gmra.mxu0 %v863
  %v941 = vpop.f32.mrf.mxu0
  %v942 = vadd.f32 %v847, %v941
  %v943 = vpop.f32.mrf.mxu0
  %v944 = vadd.f32 %v851, %v943
  %945 = vdwg.mxu0
  %946 = vmatprep.subr.mxu0 0.0
  %947 = vmatpush1.msra.mxu0 0.0
  %948 = vmatprep.subr.mxu0 0.0
  %949 = vmatpush1.msra.mxu0 0.0
  %950 = vmatprep.subr.mxu0 0.0
  %951 = vmatpush1.msra.mxu0 %v873
  %952 = vmatprep.subr.mxu0 0.0
  %953 = vmatpush1.msra.mxu0 %v838
  %954 = vmatprep.subr.mxu0 0.0
  %955 = vmatpush1.msra.mxu0 %v835
  %956 = vmatprep.subr.mxu0 0.0
  %957 = vmatpush1.msra.mxu0 %v832
  %958 = vmatprep.subr.mxu0 0.0
  %959 = vmatpush1.msra.mxu0 %v829
  %960 = vmatprep.subr.mxu0 0.0
  %961 = vmatpush1.msra.mxu0 %v826
  %962 = vmatprep.subr.mxu0 0.0
  %963 = vmatpush1.msra.mxu0 %v823
  %964 = vmatprep.subr.mxu0 0.0
  %965 = vmatpush1.msra.mxu0 %v820
  %966 = vmatprep.subr.mxu0 0.0
  %967 = vmatpush1.msra.mxu0 %v817
  %968 = vmatprep.subr.mxu0 0.0
  %969 = vmatpush1.msra.mxu0 %v814
  %970 = vmatprep.subr.mxu0 0.0
  %971 = vmatpush1.msra.mxu0 %v811
  %972 = vmatprep.subr.mxu0 0.0
  %973 = vmatpush1.msra.mxu0 %v808
  %974 = vmatprep.subr.mxu0 0.0
  %975 = vmatpush1.msra.mxu0 %v805
  %976 = vmatprep.subr.mxu0 0.0
  %977 = vmatpush1.msra.mxu0 %v802
  %978 = vmatprep.subr.mxu0 0.0
  %979 = vmatpush2.msra.mxu0 0.0
  %980 = vmatprep.subr.mxu0 0.0
  %981 = vmatpush2.msra.mxu0 0.0
  %982 = vmatprep.subr.mxu0 0.0
  %983 = vmatpush2.msra.mxu0 0.0
  %984 = vmatprep.subr.mxu0 0.0
  %985 = vmatpush2.msra.mxu0 0.0
  %986 = vmatprep.subr.mxu0 0.0
  %987 = vmatpush2.msra.mxu0 0.0
  %988 = vmatprep.subr.mxu0 0.0
  %989 = vmatpush2.msra.mxu0 0.0
  %990 = vmatprep.subr.mxu0 0.0
  %991 = vmatpush2.msra.mxu0 0.0
  %992 = vmatprep.subr.mxu0 0.0
  %993 = vmatpush2.msra.mxu0 0.0
  %994 = vmatprep.subr.mxu0 0.0
  %995 = vmatpush2.msra.mxu0 0.0
  %996 = vmatprep.subr.mxu0 0.0
  %997 = vmatpush2.msra.mxu0 0.0
  %998 = vmatprep.subr.mxu0 0.0
  %999 = vmatpush2.msra.mxu0 0.0
  %1000 = vmatprep.subr.mxu0 0.0
  %1001 = vmatpush2.msra.mxu0 0.0
  %1002 = vmatprep.subr.mxu0 0.0
  %1003 = vmatpush2.msra.mxu0 0.0
  %1004 = vmatprep.subr.mxu0 0.0
  %1005 = vmatpush2.msra.mxu0 0.0
  %1006 = vmatprep.subr.mxu0 0.0
  %1007 = vmatpush2.msra.mxu0 0.0
  %1008 = vmatprep.subr.mxu0 0.0
  %1009 = vmatpush2.msra.mxu0 0.0
  %1010 = vmatprep.mubr.f32.mxu0 0.0
  %1011 = vmatmul.mubr.f32.gmra.mxu0 %v863
  %v1012 = vpop.f32.mrf.mxu0
  %v1013 = vadd.f32 %v855, %v1012
  %v1014 = vpop.f32.mrf.mxu0
  %1015 = vdwg.mxu0
  %v1016 = vmax.f32 %v942, 0.0
  %v1017 = vmax.f32 %v944, 0.0
  %v1018 = vmax.f32 %v1013, 0.0
  %v1022 = vcombine.low %v1016, %v1017
  %v1023 = vcombine.high %v1016, %v1017
  %v1024 = vcombine.high %v1018, %v1018
  %vm1025 = vcmask 257026
  %vm1026 = vmor %vm1025, %vm652
  %1027 = vst.msk [vmem:[#allocation4] sm:$0xf] %vm1026, 0.0
  %vm1028 = vcmask 1041664
  %vm1029 = vcmask 519170
  %vm1030 = vmor %vm1029, %vm1028
  %1031 = vst.msk [vmem:[#allocation4 + $0x16] sm:$0xf] %vm1030, 0.0
  %v1033 = vunpack.c.l.s4 1983009808
  %v1034 = vunpack.c.0.s8 %v1033
  %v1035 = vlaneseq
  %v1036 = vshrl.u32 %v1035, 7
  %v1037 = vsub.s32 %v1034, %v1036
  %v1038 = vrot.slane %v1022, %v1037
  %v1040 = vunpack.c.l.s4 1983009808
  %v1041 = vunpack.c.0.s8 %v1040
  %v1042 = vlaneseq
  %v1043 = vshrl.u32 %v1042, 7
  %v1044 = vsub.s32 %v1041, %v1043
  %v1045 = vrot.slane %v1018, %v1044
  %v1046 = vcombine.low %v1038, %v1045
  %v1048 = vunpack.c.l.s4 1983009808
  %v1049 = vunpack.c.0.s8 %v1048
  %v1050 = vlaneseq
  %v1051 = vshrl.u32 %v1050, 7
  %v1052 = vsub.s32 %v1049, %v1051
  %v1053 = vrot.slane %v1023, %v1052
  %v1055 = vunpack.c.l.s4 1983009808
  %v1056 = vunpack.c.0.s8 %v1055
  %v1057 = vlaneseq
  %v1058 = vshrl.u32 %v1057, 7
  %v1059 = vsub.s32 %v1056, %v1058
  %v1060 = vrot.slane %v1024, %v1059
  %v1061 = vcombine.low %v1053, %v1060
  %vm1062 = vcmask 1044484
  %v1063 = vsel %vm1062, %v1046, %v1046
  %vm1064 = vcmask 1046534
  %v1065 = vsel %vm1064, %v1046, %v1063
  %v1066 = vrot.slane %v1061, 7
  %vm1067 = vcmask 1041409
  %v1068 = vsel %vm1067, %v1066, %v1065
  %vm1069 = vcmask 1043459
  %v1070 = vsel %vm1069, %v1066, %v1068
  %vm1071 = vcmask 1045509
  %v1072 = vsel %vm1071, %v1066, %v1070
  %vm1073 = vcmask 1047559
  %v1074 = vsel %vm1073, %v1066, %v1072
  %1075 = vrot.lane.b32.xlu0 %v1074, 32
  %v1076 = vpop.permute.xlu0 %1075
  %v1077 = vrot.slane %v1076, 6
  %vm1078 = vcmask 261120
  %v1079 = vsel %vm1078, %v1077, %v1076
  %vm1081 = vcmask 1043458
  %vm1082 = vmor %vm1081, %vm1028
  %vm1083 = vcmask 783364
  %vm1084 = vmor %vm1083, %vm1082
  %1085 = vst.msk [vmem:[#allocation4 + $0x2] sm:$0x3f] %vm1084, %v1079
  %v1086 = vrot.slane %v1046, 1
  %v1087 = vsel %vm1062, %v1086, %v1086
  %v1088 = vsel %vm1064, %v1086, %v1087
  %v1089 = vsel %vm1067, %v1061, %v1088
  %v1090 = vsel %vm1069, %v1061, %v1089
  %v1091 = vsel %vm1071, %v1061, %v1090
  %v1092 = vsel %vm1073, %v1061, %v1091
  %1093 = vrot.lane.b32.xlu0 %v1092, 96
  %v1094 = vpop.permute.xlu0 %1093
  %v1095 = vrot.slane %v1094, 6
  %vm1096 = vcmask 785408
  %v1097 = vsel %vm1096, %v1095, %v1094
  %vm1099 = vcmask 1042176
  %vm1100 = vmor %vm1081, %vm1099
  %vm1101 = vcmask 1045508
  %vm1102 = vmor %vm1101, %vm1100
  %vm1103 = vcmask 261126
  %vm1104 = vmor %vm1103, %vm1102
  %1105 = vst.msk [vmem:[#allocation4 + $0x6] sm:$0xff] %vm1104, %v1097
  %v1106 = vcombine.high %v1038, %v1045
  %v1107 = vcombine.high %v1053, %v1060
  %v1108 = vsel %vm1062, %v1106, %v1106
  %v1109 = vsel %vm1064, %v1106, %v1108
  %v1110 = vrot.slane %v1107, 7
  %v1111 = vsel %vm1067, %v1110, %v1109
  %v1112 = vsel %vm1069, %v1110, %v1111
  %v1113 = vsel %vm1071, %v1110, %v1112
  %v1114 = vsel %vm1073, %v1110, %v1113
  %1115 = vrot.lane.b32.xlu0 %v1114, 32
  %v1116 = vpop.permute.xlu0 %1115
  %v1117 = vrot.slane %v1116, 6
  %v1118 = vsel %vm1078, %v1117, %v1116
  %1120 = vst.msk [vmem:[#allocation4 + $0xc] sm:$0x3f] %vm1084, %v1118
  %v1121 = vrot.slane %v1106, 1
  %v1122 = vsel %vm1062, %v1121, %v1121
  %v1123 = vsel %vm1064, %v1121, %v1122
  %v1124 = vsel %vm1067, %v1107, %v1123
  %v1125 = vsel %vm1069, %v1107, %v1124
  %v1126 = vsel %vm1071, %v1107, %v1125
  %v1127 = vsel %vm1073, %v1107, %v1126
  %1128 = vrot.lane.b32.xlu0 %v1127, 96
  %v1129 = vpop.permute.xlu0 %1128
  %v1130 = vrot.slane %v1129, 6
  %v1131 = vsel %vm1096, %v1130, %v1129
  %1133 = vst.msk [vmem:[#allocation4 + $0x10] sm:$0xff] %vm1104, %v1131
  %v1134 = vld [vmem:[#allocation4] sm:$0xff]
  %v1137 = vunpack.c.l.s4 1966171168
  %v1138 = vunpack.c.0.s8 %v1137
  %v1139 = vlaneseq
  %v1140 = vshrl.u32 %v1139, 7
  %v1141 = vsub.s32 %v1138, %v1140
  %v1142 = vrot.slane %v1134, %v1141
  %v1143 = vcombine.high %v1142, %v1142
  %v1146 = vlaneseq
  %vm1147 = vcmp.ge.s32.totalorder %v1146, 0
  %vm1148 = vcmp.lt.s32.totalorder %v1146, 480
  %vm1149 = vmand %vm1147, %vm1148
  %1150 = vst.msk [vmem:[#allocation5] ss:$8 sm:$0xf] %vm1149, %v1142
  %1151 = vst.msk [vmem:[#allocation5] ss:$8 sm:$0x0] %vm1149, %v1142
  %s1152 = scalar_lea.vmem [#allocation5], 32
  %1153 = vst.msk [vmem:[%s1152] ss:$8 sm:$0xf] %vm1149, %v1143
  %1154 = vst.msk [vmem:[%s1152] ss:$8 sm:$0x0] %vm1149, %v1143
  %v1155 = vld [vmem:[#allocation4 + $0x2] sm:$0xff]
  %v1158 = vunpack.c.l.s4 1966171168
  %v1159 = vunpack.c.0.s8 %v1158
  %v1160 = vlaneseq
  %v1161 = vshrl.u32 %v1160, 7
  %v1162 = vsub.s32 %v1159, %v1161
  %v1163 = vrot.slane %v1155, %v1162
  %v1164 = vcombine.high %v1163, %v1163
  %1165 = vrot.lane.b32.xlu0 %v1163, 96
  %v1166 = vpop.permute.xlu0 %1165
  %1167 = vrot.lane.b32.xlu0 %v1164, 96
  %v1168 = vpop.permute.xlu0 %1167
  %v1169 = vrot.slane %v1166, 1
  %v1170 = vrot.slane %v1168, 1
  %v1171 = vsel %vm1096, %v1166, %v1169
  %v1172 = vsel %vm1096, %v1168, %v1170
  %s1175 = scalar_lea.vmem [#allocation5], 1
  %1176 = vst.msk [vmem:[%s1175] ss:$8 sm:$0xf] %vm1149, %v1171
  %1177 = vst.msk [vmem:[%s1175] ss:$8 sm:$0x0] %vm1149, %v1171
  %s1178 = scalar_lea.vmem [#allocation5], 33
  %1179 = vst.msk [vmem:[%s1178] ss:$8 sm:$0xf] %vm1149, %v1172
  %1180 = vst.msk [vmem:[%s1178] ss:$8 sm:$0x0] %vm1149, %v1172
  %v1181 = vld [vmem:[#allocation4 + $0x4] sm:$0xff]
  %v1182 = vld [vmem:[#allocation4 + $0xc] sm:$0x3]
  %v1186 = vunpack.c.l.s4 1966171168
  %v1187 = vunpack.c.0.s8 %v1186
  %v1188 = vlaneseq
  %v1189 = vshrl.u32 %v1188, 7
  %v1190 = vsub.s32 %v1187, %v1189
  %v1191 = vrot.slane %v1181, %v1190
  %v1193 = vunpack.c.l.s4 1966171168
  %v1194 = vunpack.c.0.s8 %v1193
  %v1195 = vlaneseq
  %v1196 = vshrl.u32 %v1195, 7
  %v1197 = vsub.s32 %v1194, %v1196
  %v1198 = vrot.slane %v1182, %v1197
  %v1199 = vcombine.low %v1191, %v1198
  %v1200 = vcombine.high %v1191, %v1198
  %1201 = vrot.lane.b32.xlu0 %v1199, 64
  %v1202 = vpop.permute.xlu0 %1201
  %1203 = vrot.lane.b32.xlu0 %v1200, 64
  %v1204 = vpop.permute.xlu0 %1203
  %v1205 = vrot.slane %v1202, 1
  %v1206 = vrot.slane %v1204, 1
  %vm1207 = vcmask 523264
  %v1208 = vsel %vm1207, %v1202, %v1205
  %v1209 = vsel %vm1207, %v1204, %v1206
  %s1212 = scalar_lea.vmem [#allocation5], 2
  %1213 = vst.msk [vmem:[%s1212] ss:$8 sm:$0xf] %vm1149, %v1208
  %1214 = vst.msk [vmem:[%s1212] ss:$8 sm:$0x0] %vm1149, %v1208
  %s1215 = scalar_lea.vmem [#allocation5], 34
  %1216 = vst.msk [vmem:[%s1215] ss:$8 sm:$0xf] %vm1149, %v1209
  %1217 = vst.msk [vmem:[%s1215] ss:$8 sm:$0x0] %vm1149, %v1209
  %v1218 = vld [vmem:[#allocation4 + $0x6] sm:$0xff]
  %v1219 = vld [vmem:[#allocation4 + $0xe] sm:$0x3]
  %v1223 = vunpack.c.l.s4 1966171168
  %v1224 = vunpack.c.0.s8 %v1223
  %v1225 = vlaneseq
  %v1226 = vshrl.u32 %v1225, 7
  %v1227 = vsub.s32 %v1224, %v1226
  %v1228 = vrot.slane %v1218, %v1227
  %v1230 = vunpack.c.l.s4 1966171168
  %v1231 = vunpack.c.0.s8 %v1230
  %v1232 = vlaneseq
  %v1233 = vshrl.u32 %v1232, 7
  %v1234 = vsub.s32 %v1231, %v1233
  %v1235 = vrot.slane %v1219, %v1234
  %v1236 = vcombine.low %v1228, %v1235
  %v1237 = vcombine.high %v1228, %v1235
  %1238 = vrot.lane.b32.xlu0 %v1236, 32
  %v1239 = vpop.permute.xlu0 %1238
  %1240 = vrot.lane.b32.xlu0 %v1237, 32
  %v1241 = vpop.permute.xlu0 %1240
  %v1242 = vrot.slane %v1239, 1
  %v1243 = vrot.slane %v1241, 1
  %v1244 = vsel %vm1078, %v1239, %v1242
  %v1245 = vsel %vm1078, %v1241, %v1243
  %s1248 = scalar_lea.vmem [#allocation5], 3
  %1249 = vst.msk [vmem:[%s1248] ss:$8 sm:$0xf] %vm1149, %v1244
  %1250 = vst.msk [vmem:[%s1248] ss:$8 sm:$0x0] %vm1149, %v1244
  %s1251 = scalar_lea.vmem [#allocation5], 35
  %1252 = vst.msk [vmem:[%s1251] ss:$8 sm:$0xf] %vm1149, %v1245
  %1253 = vst.msk [vmem:[%s1251] ss:$8 sm:$0x0] %vm1149, %v1245
  %v1254 = vld [vmem:[#allocation4 + $0xa] sm:$0xff]
  %v1257 = vunpack.c.l.s4 1966171168
  %v1258 = vunpack.c.0.s8 %v1257
  %v1259 = vlaneseq
  %v1260 = vshrl.u32 %v1259, 7
  %v1261 = vsub.s32 %v1258, %v1260
  %v1262 = vrot.slane %v1254, %v1261
  %v1263 = vcombine.high %v1262, %v1262
  %s1266 = scalar_lea.vmem [#allocation5], 4
  %1267 = vst.msk [vmem:[%s1266] ss:$8 sm:$0xf] %vm1149, %v1262
  %1268 = vst.msk [vmem:[%s1266] ss:$8 sm:$0x0] %vm1149, %v1262
  %s1269 = scalar_lea.vmem [#allocation5], 36
  %1270 = vst.msk [vmem:[%s1269] ss:$8 sm:$0xf] %vm1149, %v1263
  %1271 = vst.msk [vmem:[%s1269] ss:$8 sm:$0x0] %vm1149, %v1263
  %v1272 = vld [vmem:[#allocation4 + $0xc] sm:$0xff]
  %v1275 = vunpack.c.l.s4 1966171168
  %v1276 = vunpack.c.0.s8 %v1275
  %v1277 = vlaneseq
  %v1278 = vshrl.u32 %v1277, 7
  %v1279 = vsub.s32 %v1276, %v1278
  %v1280 = vrot.slane %v1272, %v1279
  %v1281 = vcombine.high %v1280, %v1280
  %1282 = vrot.lane.b32.xlu0 %v1280, 96
  %v1283 = vpop.permute.xlu0 %1282
  %1284 = vrot.lane.b32.xlu0 %v1281, 96
  %v1285 = vpop.permute.xlu0 %1284
  %v1286 = vrot.slane %v1283, 1
  %v1287 = vrot.slane %v1285, 1
  %v1288 = vsel %vm1096, %v1283, %v1286
  %v1289 = vsel %vm1096, %v1285, %v1287
  %s1292 = scalar_lea.vmem [#allocation5], 5
  %1293 = vst.msk [vmem:[%s1292] ss:$8 sm:$0xf] %vm1149, %v1288
  %1294 = vst.msk [vmem:[%s1292] ss:$8 sm:$0x0] %vm1149, %v1288
  %s1295 = scalar_lea.vmem [#allocation5], 37
  %1296 = vst.msk [vmem:[%s1295] ss:$8 sm:$0xf] %vm1149, %v1289
  %1297 = vst.msk [vmem:[%s1295] ss:$8 sm:$0x0] %vm1149, %v1289
  %v1298 = vld [vmem:[#allocation4 + $0xe] sm:$0xff]
  %v1299 = vld [vmem:[#allocation4 + $0x16] sm:$0x3]
  %v1303 = vunpack.c.l.s4 1966171168
  %v1304 = vunpack.c.0.s8 %v1303
  %v1305 = vlaneseq
  %v1306 = vshrl.u32 %v1305, 7
  %v1307 = vsub.s32 %v1304, %v1306
  %v1308 = vrot.slane %v1298, %v1307
  %v1310 = vunpack.c.l.s4 1966171168
  %v1311 = vunpack.c.0.s8 %v1310
  %v1312 = vlaneseq
  %v1313 = vshrl.u32 %v1312, 7
  %v1314 = vsub.s32 %v1311, %v1313
  %v1315 = vrot.slane %v1299, %v1314
  %v1316 = vcombine.low %v1308, %v1315
  %v1317 = vcombine.high %v1308, %v1315
  %1318 = vrot.lane.b32.xlu0 %v1316, 64
  %v1319 = vpop.permute.xlu0 %1318
  %1320 = vrot.lane.b32.xlu0 %v1317, 64
  %v1321 = vpop.permute.xlu0 %1320
  %v1322 = vrot.slane %v1319, 1
  %v1323 = vrot.slane %v1321, 1
  %v1324 = vsel %vm1207, %v1319, %v1322
  %v1325 = vsel %vm1207, %v1321, %v1323
  %s1328 = scalar_lea.vmem [#allocation5], 6
  %1329 = vst.msk [vmem:[%s1328] ss:$8 sm:$0xf] %vm1149, %v1324
  %1330 = vst.msk [vmem:[%s1328] ss:$8 sm:$0x0] %vm1149, %v1324
  %s1331 = scalar_lea.vmem [#allocation5], 38
  %1332 = vst.msk [vmem:[%s1331] ss:$8 sm:$0xf] %vm1149, %v1325
  %1333 = vst.msk [vmem:[%s1331] ss:$8 sm:$0x0] %vm1149, %v1325
  %v1334 = vld [vmem:[#allocation4 + $0x10] sm:$0xff]
  %v1335 = vld [vmem:[#allocation4 + $0x18] sm:$0x3]
  %v1339 = vunpack.c.l.s4 1966171168
  %v1340 = vunpack.c.0.s8 %v1339
  %v1341 = vlaneseq
  %v1342 = vshrl.u32 %v1341, 7
  %v1343 = vsub.s32 %v1340, %v1342
  %v1344 = vrot.slane %v1334, %v1343
  %v1346 = vunpack.c.l.s4 1966171168
  %v1347 = vunpack.c.0.s8 %v1346
  %v1348 = vlaneseq
  %v1349 = vshrl.u32 %v1348, 7
  %v1350 = vsub.s32 %v1347, %v1349
  %v1351 = vrot.slane %v1335, %v1350
  %v1352 = vcombine.low %v1344, %v1351
  %v1353 = vcombine.high %v1344, %v1351
  %1354 = vrot.lane.b32.xlu0 %v1352, 32
  %v1355 = vpop.permute.xlu0 %1354
  %1356 = vrot.lane.b32.xlu0 %v1353, 32
  %v1357 = vpop.permute.xlu0 %1356
  %v1358 = vrot.slane %v1355, 1
  %v1359 = vrot.slane %v1357, 1
  %v1360 = vsel %vm1078, %v1355, %v1358
  %v1361 = vsel %vm1078, %v1357, %v1359
  %s1364 = scalar_lea.vmem [#allocation5], 7
  %1365 = vst.msk [vmem:[%s1364] ss:$8 sm:$0xf] %vm1149, %v1360
  %1366 = vst.msk [vmem:[%s1364] ss:$8 sm:$0x0] %vm1149, %v1360
  %s1367 = scalar_lea.vmem [#allocation5], 39
  %1368 = vst.msk [vmem:[%s1367] ss:$8 sm:$0xf] %vm1149, %v1361
  %1369 = vst.msk [vmem:[%s1367] ss:$8 sm:$0x0] %vm1149, %v1361
  %v1370 = vld [vmem:[#allocation5] sm:$0xff]
  %v1371 = vld [vmem:[#allocation5 + $0x8] sm:$0xff]
  %v1372 = vld [vmem:[#allocation5 + $0x10] sm:$0xff]
  %v1373 = vld [vmem:[#allocation5 + $0x18] sm:$0xff]
  %v1374 = vld [vmem:[#allocation5 + $0x20] sm:$0xff]
  %v1375 = vld [vmem:[#allocation5 + $0x28] sm:$0xff]
  %v1376 = vld [vmem:[#allocation5 + $0x30] sm:$0xff]
  %v1377 = vld [vmem:[#allocation5 + $0x38] sm:$0xff]
  %s1378 = smul.u32 3, 480
  %s1379 = smul.u32 %s1378, 1
  %s1380 = sshll.u32 %s1379, 4
  %1381 = dma.done %s147, %s1380
  %v1382 = vld [vmem:[#allocation7] sm:$0xff]
  %v1383 = vld [vmem:[#allocation7 + $0x8] sm:$0xff]
  %v1384 = vld [vmem:[#allocation7 + $0x10] sm:$0xff]
  %v1385 = vld [vmem:[#allocation7 + $0x18] sm:$0xff]
  %v1386 = vld [vmem:[#allocation7 + $0x20] sm:$0xff]
  %v1387 = vld [vmem:[#allocation7 + $0x28] sm:$0xff]
  %v1388 = vld [vmem:[#allocation7 + $0x30] sm:$0xff]
  %v1389 = vld [vmem:[#allocation7 + $0x38] sm:$0xff]
  %v1390 = vld [vmem:[#allocation7 + $0x40] sm:$0xff]
  %v1391 = vld [vmem:[#allocation7 + $0x48] sm:$0xff]
  %v1392 = vld [vmem:[#allocation7 + $0x50] sm:$0xff]
  %v1393 = vld [vmem:[#allocation7 + $0x58] sm:$0xff]
  %v1394 = vld [vmem:[#allocation7 + $0x60] sm:$0xff]
  %v1395 = vld [vmem:[#allocation7 + $0x68] sm:$0xff]
  %v1396 = vld [vmem:[#allocation7 + $0x70] sm:$0xff]
  %v1397 = vld [vmem:[#allocation7 + $0x78] sm:$0xff]
  %v1398 = vld [vmem:[#allocation7 + $0x80] sm:$0xff]
  %v1399 = vld [vmem:[#allocation7 + $0x88] sm:$0xff]
  %v1400 = vld [vmem:[#allocation7 + $0x90] sm:$0xff]
  %v1401 = vld [vmem:[#allocation7 + $0x98] sm:$0xff]
  %v1402 = vld [vmem:[#allocation7 + $0xa0] sm:$0xff]
  %v1403 = vld [vmem:[#allocation7 + $0xa8] sm:$0xff]
  %v1404 = vld [vmem:[#allocation7 + $0xb0] sm:$0xff]
  %v1405 = vld [vmem:[#allocation7 + $0xb8] sm:$0xff]
  %v1406 = vld [vmem:[#allocation7 + $0xc0] sm:$0xff]
  %v1407 = vld [vmem:[#allocation7 + $0xc8] sm:$0xff]
  %v1408 = vld [vmem:[#allocation7 + $0xd0] sm:$0xff]
  %v1409 = vld [vmem:[#allocation7 + $0xd8] sm:$0xff]
  %v1410 = vld [vmem:[#allocation7 + $0xe0] sm:$0xff]
  %v1411 = vld [vmem:[#allocation7 + $0xe8] sm:$0xff]
  %v1412 = vld [vmem:[#allocation7 + $0xf0] sm:$0xff]
  %v1413 = vld [vmem:[#allocation7 + $0xf8] sm:$0xff]
  %v1414 = vld [vmem:[#allocation7 + $0x100] sm:$0xff]
  %v1415 = vld [vmem:[#allocation7 + $0x108] sm:$0xff]
  %v1416 = vld [vmem:[#allocation7 + $0x110] sm:$0xff]
  %v1417 = vld [vmem:[#allocation7 + $0x118] sm:$0xff]
  %v1418 = vld [vmem:[#allocation7 + $0x120] sm:$0xff]
  %v1419 = vld [vmem:[#allocation7 + $0x128] sm:$0xff]
  %v1420 = vld [vmem:[#allocation7 + $0x130] sm:$0xff]
  %v1421 = vld [vmem:[#allocation7 + $0x138] sm:$0xff]
  %v1422 = vld [vmem:[#allocation7 + $0x140] sm:$0xff]
  %v1423 = vld [vmem:[#allocation7 + $0x148] sm:$0xff]
  %v1424 = vld [vmem:[#allocation7 + $0x150] sm:$0xff]
  %v1425 = vld [vmem:[#allocation7 + $0x158] sm:$0xff]
  %v1426 = vld [vmem:[#allocation7 + $0x160] sm:$0xff]
  %v1427 = vld [vmem:[#allocation7 + $0x168] sm:$0xff]
  %v1428 = vld [vmem:[#allocation7 + $0x170] sm:$0xff]
  %v1429 = vld [vmem:[#allocation7 + $0x178] sm:$0xff]
  %v1430 = vld [vmem:[#allocation7 + $0x180] sm:$0xff]
  %v1431 = vld [vmem:[#allocation7 + $0x188] sm:$0xff]
  %v1432 = vld [vmem:[#allocation7 + $0x190] sm:$0xff]
  %v1433 = vld [vmem:[#allocation7 + $0x198] sm:$0xff]
  %v1434 = vld [vmem:[#allocation7 + $0x1a0] sm:$0xff]
  %v1435 = vld [vmem:[#allocation7 + $0x1a8] sm:$0xff]
  %v1436 = vld [vmem:[#allocation7 + $0x1b0] sm:$0xff]
  %v1437 = vld [vmem:[#allocation7 + $0x1b8] sm:$0xff]
  %v1438 = vld [vmem:[#allocation7 + $0x1c0] sm:$0xff]
  %v1439 = vld [vmem:[#allocation7 + $0x1c8] sm:$0xff]
  %v1440 = vld [vmem:[#allocation7 + $0x1d0] sm:$0xff]
  %v1441 = vld [vmem:[#allocation7 + $0x1d8] sm:$0xff]
  %v1442 = vld [vmem:[%s4] sm:$0x1]
  %v1444 = vlaneseq
  %v1445 = vshrl.u32 %v1444, 7
  %v1446 = vsub.s32 0, %v1445
  %v1447 = vrot.slane %v1442, %v1446
  %v1450 = vsel %vm1096, %v1373, 0
  %v1453 = vsel %vm1096, %v1377, 0
  %1455 = vmatprep.subr.mxu0 0.0
  %1456 = vmatpush1.msra.mxu0 %v1397
  %1457 = vmatprep.subr.mxu0 0.0
  %1458 = vmatpush1.msra.mxu0 %v1396
  %1459 = vmatprep.subr.mxu0 0.0
  %1460 = vmatpush1.msra.mxu0 %v1395
  %1461 = vmatprep.subr.mxu0 0.0
  %1462 = vmatpush1.msra.mxu0 %v1394
  %1463 = vmatprep.subr.mxu0 0.0
  %1464 = vmatpush1.msra.mxu0 %v1393
  %1465 = vmatprep.subr.mxu0 0.0
  %1466 = vmatpush1.msra.mxu0 %v1392
  %1467 = vmatprep.subr.mxu0 0.0
  %1468 = vmatpush1.msra.mxu0 %v1391
  %1469 = vmatprep.subr.mxu0 0.0
  %1470 = vmatpush1.msra.mxu0 %v1390
  %1471 = vmatprep.subr.mxu0 0.0
  %1472 = vmatpush1.msra.mxu0 %v1389
  %1473 = vmatprep.subr.mxu0 0.0
  %1474 = vmatpush1.msra.mxu0 %v1388
  %1475 = vmatprep.subr.mxu0 0.0
  %1476 = vmatpush1.msra.mxu0 %v1387
  %1477 = vmatprep.subr.mxu0 0.0
  %1478 = vmatpush1.msra.mxu0 %v1386
  %1479 = vmatprep.subr.mxu0 0.0
  %1480 = vmatpush1.msra.mxu0 %v1385
  %1481 = vmatprep.subr.mxu0 0.0
  %1482 = vmatpush1.msra.mxu0 %v1384
  %1483 = vmatprep.subr.mxu0 0.0
  %1484 = vmatpush1.msra.mxu0 %v1383
  %1485 = vmatprep.subr.mxu0 0.0
  %1486 = vmatpush1.msra.mxu0 %v1382
  %1487 = vmatprep.subr.mxu0 0.0
  %1488 = vmatpush2.msra.mxu0 %v1413
  %1489 = vmatprep.subr.mxu0 0.0
  %1490 = vmatpush2.msra.mxu0 %v1412
  %1491 = vmatprep.subr.mxu0 0.0
  %1492 = vmatpush2.msra.mxu0 %v1411
  %1493 = vmatprep.subr.mxu0 0.0
  %1494 = vmatpush2.msra.mxu0 %v1410
  %1495 = vmatprep.subr.mxu0 0.0
  %1496 = vmatpush2.msra.mxu0 %v1409
  %1497 = vmatprep.subr.mxu0 0.0
  %1498 = vmatpush2.msra.mxu0 %v1408
  %1499 = vmatprep.subr.mxu0 0.0
  %1500 = vmatpush2.msra.mxu0 %v1407
  %1501 = vmatprep.subr.mxu0 0.0
  %1502 = vmatpush2.msra.mxu0 %v1406
  %1503 = vmatprep.subr.mxu0 0.0
  %1504 = vmatpush2.msra.mxu0 %v1405
  %1505 = vmatprep.subr.mxu0 0.0
  %1506 = vmatpush2.msra.mxu0 %v1404
  %1507 = vmatprep.subr.mxu0 0.0
  %1508 = vmatpush2.msra.mxu0 %v1403
  %1509 = vmatprep.subr.mxu0 0.0
  %1510 = vmatpush2.msra.mxu0 %v1402
  %1511 = vmatprep.subr.mxu0 0.0
  %1512 = vmatpush2.msra.mxu0 %v1401
  %1513 = vmatprep.subr.mxu0 0.0
  %1514 = vmatpush2.msra.mxu0 %v1400
  %1515 = vmatprep.subr.mxu0 0.0
  %1516 = vmatpush2.msra.mxu0 %v1399
  %1517 = vmatprep.subr.mxu0 0.0
  %1518 = vmatpush2.msra.mxu0 %v1398
  %1519 = vmatprep.mubr.f32.mxu0 %v1371
  %1520 = vmatmul.mubr.f32.gmra.mxu0 %v1370
  %v1521 = vpop.f32.mrf.mxu0
  %v1522 = vadd.f32 %v1447, %v1521
  %v1523 = vpop.f32.mrf.mxu0
  %1524 = vmatprep.mubr.f32.mxu0 %v1375
  %1525 = vmatmul.mubr.f32.gmra.mxu0 %v1374
  %v1526 = vpop.f32.mrf.mxu0
  %v1527 = vadd.f32 %v1447, %v1526
  %v1528 = vpop.f32.mrf.mxu0
  %1529 = vdwg.mxu0
  %1530 = vmatprep.subr.mxu0 0.0
  %1531 = vmatpush1.msra.mxu0 %v1429
  %1532 = vmatprep.subr.mxu0 0.0
  %1533 = vmatpush1.msra.mxu0 %v1428
  %1534 = vmatprep.subr.mxu0 0.0
  %1535 = vmatpush1.msra.mxu0 %v1427
  %1536 = vmatprep.subr.mxu0 0.0
  %1537 = vmatpush1.msra.mxu0 %v1426
  %1538 = vmatprep.subr.mxu0 0.0
  %1539 = vmatpush1.msra.mxu0 %v1425
  %1540 = vmatprep.subr.mxu0 0.0
  %1541 = vmatpush1.msra.mxu0 %v1424
  %1542 = vmatprep.subr.mxu0 0.0
  %1543 = vmatpush1.msra.mxu0 %v1423
  %1544 = vmatprep.subr.mxu0 0.0
  %1545 = vmatpush1.msra.mxu0 %v1422
  %1546 = vmatprep.subr.mxu0 0.0
  %1547 = vmatpush1.msra.mxu0 %v1421
  %1548 = vmatprep.subr.mxu0 0.0
  %1549 = vmatpush1.msra.mxu0 %v1420
  %1550 = vmatprep.subr.mxu0 0.0
  %1551 = vmatpush1.msra.mxu0 %v1419
  %1552 = vmatprep.subr.mxu0 0.0
  %1553 = vmatpush1.msra.mxu0 %v1418
  %1554 = vmatprep.subr.mxu0 0.0
  %1555 = vmatpush1.msra.mxu0 %v1417
  %1556 = vmatprep.subr.mxu0 0.0
  %1557 = vmatpush1.msra.mxu0 %v1416
  %1558 = vmatprep.subr.mxu0 0.0
  %1559 = vmatpush1.msra.mxu0 %v1415
  %1560 = vmatprep.subr.mxu0 0.0
  %1561 = vmatpush1.msra.mxu0 %v1414
  %1562 = vmatprep.subr.mxu0 0.0
  %1563 = vmatpush2.msra.mxu0 0.0
  %1564 = vmatprep.subr.mxu0 0.0
  %1565 = vmatpush2.msra.mxu0 0.0
  %1566 = vmatprep.subr.mxu0 0.0
  %1567 = vmatpush2.msra.mxu0 0.0
  %1568 = vmatprep.subr.mxu0 0.0
  %1569 = vmatpush2.msra.mxu0 0.0
  %1570 = vmatprep.subr.mxu0 0.0
  %1571 = vmatpush2.msra.mxu0 %v1441
  %1572 = vmatprep.subr.mxu0 0.0
  %1573 = vmatpush2.msra.mxu0 %v1440
  %1574 = vmatprep.subr.mxu0 0.0
  %1575 = vmatpush2.msra.mxu0 %v1439
  %1576 = vmatprep.subr.mxu0 0.0
  %1577 = vmatpush2.msra.mxu0 %v1438
  %1578 = vmatprep.subr.mxu0 0.0
  %1579 = vmatpush2.msra.mxu0 %v1437
  %1580 = vmatprep.subr.mxu0 0.0
  %1581 = vmatpush2.msra.mxu0 %v1436
  %1582 = vmatprep.subr.mxu0 0.0
  %1583 = vmatpush2.msra.mxu0 %v1435
  %1584 = vmatprep.subr.mxu0 0.0
  %1585 = vmatpush2.msra.mxu0 %v1434
  %1586 = vmatprep.subr.mxu0 0.0
  %1587 = vmatpush2.msra.mxu0 %v1433
  %1588 = vmatprep.subr.mxu0 0.0
  %1589 = vmatpush2.msra.mxu0 %v1432
  %1590 = vmatprep.subr.mxu0 0.0
  %1591 = vmatpush2.msra.mxu0 %v1431
  %1592 = vmatprep.subr.mxu0 0.0
  %1593 = vmatpush2.msra.mxu0 %v1430
  %1594 = vmatprep.mubr.f32.mxu0 %v1450
  %1595 = vmatmul.mubr.f32.gmra.mxu0 %v1372
  %v1596 = vpop.f32.mrf.mxu0
  %v1597 = vadd.f32 %v1522, %v1596
  %v1598 = vpop.f32.mrf.mxu0
  %1599 = vmatprep.mubr.f32.mxu0 %v1453
  %1600 = vmatmul.mubr.f32.gmra.mxu0 %v1376
  %v1601 = vpop.f32.mrf.mxu0
  %v1602 = vadd.f32 %v1527, %v1601
  %v1603 = vpop.f32.mrf.mxu0
  %1604 = vdwg.mxu0
  %v1605 = vxor.u32 %v1597, 2147483648
  %v1606 = vxor.u32 %v1602, 2147483648
  %v1607 = vmul.f32 %v1605, 1.442695
  %v1608 = vpow.pop %v1607
  %v1609 = vmul.f32 %v1606, 1.442695
  %v1610 = vpow.pop %v1609
  %v1611 = vadd.f32 %v1608, 1.0
  %v1612 = vadd.f32 %v1610, 1.0
  %v1613 = vrcp.pop %v1611
  %v1614 = vmul.f32 1.0, %v1613
  %v1615 = vrcp.pop %v1612
  %v1616 = vmul.f32 1.0, %v1615
  %1617 = vst.msk [vmem:[%s7] sm:$0xff] %vm1078, %v1614
  %1618 = vst.msk [vmem:[%s7 + $0x18] sm:$0xff] %vm1078, %v1616
  %s1619 = scalar_lea.vmem [#allocation7], 480
  %v1620 = vld [vmem:[%s1619] sm:$0xff]
  %v1621 = vld [vmem:[%s1619 + $0x8] sm:$0xff]
  %v1622 = vld [vmem:[%s1619 + $0x10] sm:$0xff]
  %v1623 = vld [vmem:[%s1619 + $0x18] sm:$0xff]
  %v1624 = vld [vmem:[%s1619 + $0x20] sm:$0xff]
  %v1625 = vld [vmem:[%s1619 + $0x28] sm:$0xff]
  %v1626 = vld [vmem:[%s1619 + $0x30] sm:$0xff]
  %v1627 = vld [vmem:[%s1619 + $0x38] sm:$0xff]
  %v1628 = vld [vmem:[%s1619 + $0x40] sm:$0xff]
  %v1629 = vld [vmem:[%s1619 + $0x48] sm:$0xff]
  %v1630 = vld [vmem:[%s1619 + $0x50] sm:$0xff]
  %v1631 = vld [vmem:[%s1619 + $0x58] sm:$0xff]
  %v1632 = vld [vmem:[%s1619 + $0x60] sm:$0xff]
  %v1633 = vld [vmem:[%s1619 + $0x68] sm:$0xff]
  %v1634 = vld [vmem:[%s1619 + $0x70] sm:$0xff]
  %v1635 = vld [vmem:[%s1619 + $0x78] sm:$0xff]
  %v1636 = vld [vmem:[%s1619 + $0x80] sm:$0xff]
  %v1637 = vld [vmem:[%s1619 + $0x88] sm:$0xff]
  %v1638 = vld [vmem:[%s1619 + $0x90] sm:$0xff]
  %v1639 = vld [vmem:[%s1619 + $0x98] sm:$0xff]
  %v1640 = vld [vmem:[%s1619 + $0xa0] sm:$0xff]
  %v1641 = vld [vmem:[%s1619 + $0xa8] sm:$0xff]
  %v1642 = vld [vmem:[%s1619 + $0xb0] sm:$0xff]
  %v1643 = vld [vmem:[%s1619 + $0xb8] sm:$0xff]
  %v1644 = vld [vmem:[%s1619 + $0xc0] sm:$0xff]
  %v1645 = vld [vmem:[%s1619 + $0xc8] sm:$0xff]
  %v1646 = vld [vmem:[%s1619 + $0xd0] sm:$0xff]
  %v1647 = vld [vmem:[%s1619 + $0xd8] sm:$0xff]
  %v1648 = vld [vmem:[%s1619 + $0xe0] sm:$0xff]
  %v1649 = vld [vmem:[%s1619 + $0xe8] sm:$0xff]
  %v1650 = vld [vmem:[%s1619 + $0xf0] sm:$0xff]
  %v1651 = vld [vmem:[%s1619 + $0xf8] sm:$0xff]
  %v1652 = vld [vmem:[%s1619 + $0x100] sm:$0xff]
  %v1653 = vld [vmem:[%s1619 + $0x108] sm:$0xff]
  %v1654 = vld [vmem:[%s1619 + $0x110] sm:$0xff]
  %v1655 = vld [vmem:[%s1619 + $0x118] sm:$0xff]
  %v1656 = vld [vmem:[%s1619 + $0x120] sm:$0xff]
  %v1657 = vld [vmem:[%s1619 + $0x128] sm:$0xff]
  %v1658 = vld [vmem:[%s1619 + $0x130] sm:$0xff]
  %v1659 = vld [vmem:[%s1619 + $0x138] sm:$0xff]
  %v1660 = vld [vmem:[%s1619 + $0x140] sm:$0xff]
  %v1661 = vld [vmem:[%s1619 + $0x148] sm:$0xff]
  %v1662 = vld [vmem:[%s1619 + $0x150] sm:$0xff]
  %v1663 = vld [vmem:[%s1619 + $0x158] sm:$0xff]
  %v1664 = vld [vmem:[%s1619 + $0x160] sm:$0xff]
  %v1665 = vld [vmem:[%s1619 + $0x168] sm:$0xff]
  %v1666 = vld [vmem:[%s1619 + $0x170] sm:$0xff]
  %v1667 = vld [vmem:[%s1619 + $0x178] sm:$0xff]
  %v1668 = vld [vmem:[%s1619 + $0x180] sm:$0xff]
  %v1669 = vld [vmem:[%s1619 + $0x188] sm:$0xff]
  %v1670 = vld [vmem:[%s1619 + $0x190] sm:$0xff]
  %v1671 = vld [vmem:[%s1619 + $0x198] sm:$0xff]
  %v1672 = vld [vmem:[%s1619 + $0x1a0] sm:$0xff]
  %v1673 = vld [vmem:[%s1619 + $0x1a8] sm:$0xff]
  %v1674 = vld [vmem:[%s1619 + $0x1b0] sm:$0xff]
  %v1675 = vld [vmem:[%s1619 + $0x1b8] sm:$0xff]
  %v1676 = vld [vmem:[%s1619 + $0x1c0] sm:$0xff]
  %v1677 = vld [vmem:[%s1619 + $0x1c8] sm:$0xff]
  %v1678 = vld [vmem:[%s1619 + $0x1d0] sm:$0xff]
  %v1679 = vld [vmem:[%s1619 + $0x1d8] sm:$0xff]
  %s1680 = scalar_lea.vmem %s4, 1
  %v1681 = vld [vmem:[%s1680] sm:$0x1]
  %v1683 = vlaneseq
  %v1684 = vshrl.u32 %v1683, 7
  %v1685 = vsub.s32 0, %v1684
  %v1686 = vrot.slane %v1681, %v1685
  %1688 = vmatprep.subr.mxu0 0.0
  %1689 = vmatpush1.msra.mxu0 %v1635
  %1690 = vmatprep.subr.mxu0 0.0
  %1691 = vmatpush1.msra.mxu0 %v1634
  %1692 = vmatprep.subr.mxu0 0.0
  %1693 = vmatpush1.msra.mxu0 %v1633
  %1694 = vmatprep.subr.mxu0 0.0
  %1695 = vmatpush1.msra.mxu0 %v1632
  %1696 = vmatprep.subr.mxu0 0.0
  %1697 = vmatpush1.msra.mxu0 %v1631
  %1698 = vmatprep.subr.mxu0 0.0
  %1699 = vmatpush1.msra.mxu0 %v1630
  %1700 = vmatprep.subr.mxu0 0.0
  %1701 = vmatpush1.msra.mxu0 %v1629
  %1702 = vmatprep.subr.mxu0 0.0
  %1703 = vmatpush1.msra.mxu0 %v1628
  %1704 = vmatprep.subr.mxu0 0.0
  %1705 = vmatpush1.msra.mxu0 %v1627
  %1706 = vmatprep.subr.mxu0 0.0
  %1707 = vmatpush1.msra.mxu0 %v1626
  %1708 = vmatprep.subr.mxu0 0.0
  %1709 = vmatpush1.msra.mxu0 %v1625
  %1710 = vmatprep.subr.mxu0 0.0
  %1711 = vmatpush1.msra.mxu0 %v1624
  %1712 = vmatprep.subr.mxu0 0.0
  %1713 = vmatpush1.msra.mxu0 %v1623
  %1714 = vmatprep.subr.mxu0 0.0
  %1715 = vmatpush1.msra.mxu0 %v1622
  %1716 = vmatprep.subr.mxu0 0.0
  %1717 = vmatpush1.msra.mxu0 %v1621
  %1718 = vmatprep.subr.mxu0 0.0
  %1719 = vmatpush1.msra.mxu0 %v1620
  %1720 = vmatprep.subr.mxu0 0.0
  %1721 = vmatpush2.msra.mxu0 %v1651
  %1722 = vmatprep.subr.mxu0 0.0
  %1723 = vmatpush2.msra.mxu0 %v1650
  %1724 = vmatprep.subr.mxu0 0.0
  %1725 = vmatpush2.msra.mxu0 %v1649
  %1726 = vmatprep.subr.mxu0 0.0
  %1727 = vmatpush2.msra.mxu0 %v1648
  %1728 = vmatprep.subr.mxu0 0.0
  %1729 = vmatpush2.msra.mxu0 %v1647
  %1730 = vmatprep.subr.mxu0 0.0
  %1731 = vmatpush2.msra.mxu0 %v1646
  %1732 = vmatprep.subr.mxu0 0.0
  %1733 = vmatpush2.msra.mxu0 %v1645
  %1734 = vmatprep.subr.mxu0 0.0
  %1735 = vmatpush2.msra.mxu0 %v1644
  %1736 = vmatprep.subr.mxu0 0.0
  %1737 = vmatpush2.msra.mxu0 %v1643
  %1738 = vmatprep.subr.mxu0 0.0
  %1739 = vmatpush2.msra.mxu0 %v1642
  %1740 = vmatprep.subr.mxu0 0.0
  %1741 = vmatpush2.msra.mxu0 %v1641
  %1742 = vmatprep.subr.mxu0 0.0
  %1743 = vmatpush2.msra.mxu0 %v1640
  %1744 = vmatprep.subr.mxu0 0.0
  %1745 = vmatpush2.msra.mxu0 %v1639
  %1746 = vmatprep.subr.mxu0 0.0
  %1747 = vmatpush2.msra.mxu0 %v1638
  %1748 = vmatprep.subr.mxu0 0.0
  %1749 = vmatpush2.msra.mxu0 %v1637
  %1750 = vmatprep.subr.mxu0 0.0
  %1751 = vmatpush2.msra.mxu0 %v1636
  %1752 = vmatprep.mubr.f32.mxu0 %v1371
  %1753 = vmatmul.mubr.f32.gmra.mxu0 %v1370
  %v1754 = vpop.f32.mrf.mxu0
  %v1755 = vadd.f32 %v1686, %v1754
  %v1756 = vpop.f32.mrf.mxu0
  %1757 = vmatprep.mubr.f32.mxu0 %v1375
  %1758 = vmatmul.mubr.f32.gmra.mxu0 %v1374
  %v1759 = vpop.f32.mrf.mxu0
  %v1760 = vadd.f32 %v1686, %v1759
  %v1761 = vpop.f32.mrf.mxu0
  %1762 = vdwg.mxu0
  %1763 = vmatprep.subr.mxu0 0.0
  %1764 = vmatpush1.msra.mxu0 %v1667
  %1765 = vmatprep.subr.mxu0 0.0
  %1766 = vmatpush1.msra.mxu0 %v1666
  %1767 = vmatprep.subr.mxu0 0.0
  %1768 = vmatpush1.msra.mxu0 %v1665
  %1769 = vmatprep.subr.mxu0 0.0
  %1770 = vmatpush1.msra.mxu0 %v1664
  %1771 = vmatprep.subr.mxu0 0.0
  %1772 = vmatpush1.msra.mxu0 %v1663
  %1773 = vmatprep.subr.mxu0 0.0
  %1774 = vmatpush1.msra.mxu0 %v1662
  %1775 = vmatprep.subr.mxu0 0.0
  %1776 = vmatpush1.msra.mxu0 %v1661
  %1777 = vmatprep.subr.mxu0 0.0
  %1778 = vmatpush1.msra.mxu0 %v1660
  %1779 = vmatprep.subr.mxu0 0.0
  %1780 = vmatpush1.msra.mxu0 %v1659
  %1781 = vmatprep.subr.mxu0 0.0
  %1782 = vmatpush1.msra.mxu0 %v1658
  %1783 = vmatprep.subr.mxu0 0.0
  %1784 = vmatpush1.msra.mxu0 %v1657
  %1785 = vmatprep.subr.mxu0 0.0
  %1786 = vmatpush1.msra.mxu0 %v1656
  %1787 = vmatprep.subr.mxu0 0.0
  %1788 = vmatpush1.msra.mxu0 %v1655
  %1789 = vmatprep.subr.mxu0 0.0
  %1790 = vmatpush1.msra.mxu0 %v1654
  %1791 = vmatprep.subr.mxu0 0.0
  %1792 = vmatpush1.msra.mxu0 %v1653
  %1793 = vmatprep.subr.mxu0 0.0
  %1794 = vmatpush1.msra.mxu0 %v1652
  %1795 = vmatprep.subr.mxu0 0.0
  %1796 = vmatpush2.msra.mxu0 0.0
  %1797 = vmatprep.subr.mxu0 0.0
  %1798 = vmatpush2.msra.mxu0 0.0
  %1799 = vmatprep.subr.mxu0 0.0
  %1800 = vmatpush2.msra.mxu0 0.0
  %1801 = vmatprep.subr.mxu0 0.0
  %1802 = vmatpush2.msra.mxu0 0.0
  %1803 = vmatprep.subr.mxu0 0.0
  %1804 = vmatpush2.msra.mxu0 %v1679
  %1805 = vmatprep.subr.mxu0 0.0
  %1806 = vmatpush2.msra.mxu0 %v1678
  %1807 = vmatprep.subr.mxu0 0.0
  %1808 = vmatpush2.msra.mxu0 %v1677
  %1809 = vmatprep.subr.mxu0 0.0
  %1810 = vmatpush2.msra.mxu0 %v1676
  %1811 = vmatprep.subr.mxu0 0.0
  %1812 = vmatpush2.msra.mxu0 %v1675
  %1813 = vmatprep.subr.mxu0 0.0
  %1814 = vmatpush2.msra.mxu0 %v1674
  %1815 = vmatprep.subr.mxu0 0.0
  %1816 = vmatpush2.msra.mxu0 %v1673
  %1817 = vmatprep.subr.mxu0 0.0
  %1818 = vmatpush2.msra.mxu0 %v1672
  %1819 = vmatprep.subr.mxu0 0.0
  %1820 = vmatpush2.msra.mxu0 %v1671
  %1821 = vmatprep.subr.mxu0 0.0
  %1822 = vmatpush2.msra.mxu0 %v1670
  %1823 = vmatprep.subr.mxu0 0.0
  %1824 = vmatpush2.msra.mxu0 %v1669
  %1825 = vmatprep.subr.mxu0 0.0
  %1826 = vmatpush2.msra.mxu0 %v1668
  %1827 = vmatprep.mubr.f32.mxu0 %v1450
  %1828 = vmatmul.mubr.f32.gmra.mxu0 %v1372
  %v1829 = vpop.f32.mrf.mxu0
  %v1830 = vadd.f32 %v1755, %v1829
  %v1831 = vpop.f32.mrf.mxu0
  %1832 = vmatprep.mubr.f32.mxu0 %v1453
  %1833 = vmatmul.mubr.f32.gmra.mxu0 %v1376
  %v1834 = vpop.f32.mrf.mxu0
  %v1835 = vadd.f32 %v1760, %v1834
  %v1836 = vpop.f32.mrf.mxu0
  %1837 = vdwg.mxu0
  %v1838 = vxor.u32 %v1830, 2147483648
  %v1839 = vxor.u32 %v1835, 2147483648
  %v1840 = vmul.f32 %v1838, 1.442695
  %v1841 = vpow.pop %v1840
  %v1842 = vmul.f32 %v1839, 1.442695
  %v1843 = vpow.pop %v1842
  %v1844 = vadd.f32 %v1841, 1.0
  %v1845 = vadd.f32 %v1843, 1.0
  %v1846 = vrcp.pop %v1844
  %v1847 = vmul.f32 1.0, %v1846
  %v1848 = vrcp.pop %v1845
  %v1849 = vmul.f32 1.0, %v1848
  %s1850 = scalar_lea.vmem %s7, 8
  %1851 = vst.msk [vmem:[%s1850] sm:$0xff] %vm1078, %v1847
  %1852 = vst.msk [vmem:[%s1850 + $0x18] sm:$0xff] %vm1078, %v1849
  %s1853 = scalar_lea.vmem [#allocation7], 960
  %v1854 = vld [vmem:[%s1853] sm:$0xff]
  %v1855 = vld [vmem:[%s1853 + $0x8] sm:$0xff]
  %v1856 = vld [vmem:[%s1853 + $0x10] sm:$0xff]
  %v1857 = vld [vmem:[%s1853 + $0x18] sm:$0xff]
  %v1858 = vld [vmem:[%s1853 + $0x20] sm:$0xff]
  %v1859 = vld [vmem:[%s1853 + $0x28] sm:$0xff]
  %v1860 = vld [vmem:[%s1853 + $0x30] sm:$0xff]
  %v1861 = vld [vmem:[%s1853 + $0x38] sm:$0xff]
  %v1862 = vld [vmem:[%s1853 + $0x40] sm:$0xff]
  %v1863 = vld [vmem:[%s1853 + $0x48] sm:$0xff]
  %v1864 = vld [vmem:[%s1853 + $0x50] sm:$0xff]
  %v1865 = vld [vmem:[%s1853 + $0x58] sm:$0xff]
  %v1866 = vld [vmem:[%s1853 + $0x60] sm:$0xff]
  %v1867 = vld [vmem:[%s1853 + $0x68] sm:$0xff]
  %v1868 = vld [vmem:[%s1853 + $0x70] sm:$0xff]
  %v1869 = vld [vmem:[%s1853 + $0x78] sm:$0xff]
  %v1870 = vld [vmem:[%s1853 + $0x80] sm:$0xff]
  %v1871 = vld [vmem:[%s1853 + $0x88] sm:$0xff]
  %v1872 = vld [vmem:[%s1853 + $0x90] sm:$0xff]
  %v1873 = vld [vmem:[%s1853 + $0x98] sm:$0xff]
  %v1874 = vld [vmem:[%s1853 + $0xa0] sm:$0xff]
  %v1875 = vld [vmem:[%s1853 + $0xa8] sm:$0xff]
  %v1876 = vld [vmem:[%s1853 + $0xb0] sm:$0xff]
  %v1877 = vld [vmem:[%s1853 + $0xb8] sm:$0xff]
  %v1878 = vld [vmem:[%s1853 + $0xc0] sm:$0xff]
  %v1879 = vld [vmem:[%s1853 + $0xc8] sm:$0xff]
  %v1880 = vld [vmem:[%s1853 + $0xd0] sm:$0xff]
  %v1881 = vld [vmem:[%s1853 + $0xd8] sm:$0xff]
  %v1882 = vld [vmem:[%s1853 + $0xe0] sm:$0xff]
  %v1883 = vld [vmem:[%s1853 + $0xe8] sm:$0xff]
  %v1884 = vld [vmem:[%s1853 + $0xf0] sm:$0xff]
  %v1885 = vld [vmem:[%s1853 + $0xf8] sm:$0xff]
  %v1886 = vld [vmem:[%s1853 + $0x100] sm:$0xff]
  %v1887 = vld [vmem:[%s1853 + $0x108] sm:$0xff]
  %v1888 = vld [vmem:[%s1853 + $0x110] sm:$0xff]
  %v1889 = vld [vmem:[%s1853 + $0x118] sm:$0xff]
  %v1890 = vld [vmem:[%s1853 + $0x120] sm:$0xff]
  %v1891 = vld [vmem:[%s1853 + $0x128] sm:$0xff]
  %v1892 = vld [vmem:[%s1853 + $0x130] sm:$0xff]
  %v1893 = vld [vmem:[%s1853 + $0x138] sm:$0xff]
  %v1894 = vld [vmem:[%s1853 + $0x140] sm:$0xff]
  %v1895 = vld [vmem:[%s1853 + $0x148] sm:$0xff]
  %v1896 = vld [vmem:[%s1853 + $0x150] sm:$0xff]
  %v1897 = vld [vmem:[%s1853 + $0x158] sm:$0xff]
  %v1898 = vld [vmem:[%s1853 + $0x160] sm:$0xff]
  %v1899 = vld [vmem:[%s1853 + $0x168] sm:$0xff]
  %v1900 = vld [vmem:[%s1853 + $0x170] sm:$0xff]
  %v1901 = vld [vmem:[%s1853 + $0x178] sm:$0xff]
  %v1902 = vld [vmem:[%s1853 + $0x180] sm:$0xff]
  %v1903 = vld [vmem:[%s1853 + $0x188] sm:$0xff]
  %v1904 = vld [vmem:[%s1853 + $0x190] sm:$0xff]
  %v1905 = vld [vmem:[%s1853 + $0x198] sm:$0xff]
  %v1906 = vld [vmem:[%s1853 + $0x1a0] sm:$0xff]
  %v1907 = vld [vmem:[%s1853 + $0x1a8] sm:$0xff]
  %v1908 = vld [vmem:[%s1853 + $0x1b0] sm:$0xff]
  %v1909 = vld [vmem:[%s1853 + $0x1b8] sm:$0xff]
  %v1910 = vld [vmem:[%s1853 + $0x1c0] sm:$0xff]
  %v1911 = vld [vmem:[%s1853 + $0x1c8] sm:$0xff]
  %v1912 = vld [vmem:[%s1853 + $0x1d0] sm:$0xff]
  %v1913 = vld [vmem:[%s1853 + $0x1d8] sm:$0xff]
  %s1914 = scalar_lea.vmem %s4, 2
  %v1915 = vld [vmem:[%s1914] sm:$0x1]
  %v1917 = vlaneseq
  %v1918 = vshrl.u32 %v1917, 7
  %v1919 = vsub.s32 0, %v1918
  %v1920 = vrot.slane %v1915, %v1919
  %1922 = vmatprep.subr.mxu0 0.0
  %1923 = vmatpush1.msra.mxu0 %v1869
  %1924 = vmatprep.subr.mxu0 0.0
  %1925 = vmatpush1.msra.mxu0 %v1868
  %1926 = vmatprep.subr.mxu0 0.0
  %1927 = vmatpush1.msra.mxu0 %v1867
  %1928 = vmatprep.subr.mxu0 0.0
  %1929 = vmatpush1.msra.mxu0 %v1866
  %1930 = vmatprep.subr.mxu0 0.0
  %1931 = vmatpush1.msra.mxu0 %v1865
  %1932 = vmatprep.subr.mxu0 0.0
  %1933 = vmatpush1.msra.mxu0 %v1864
  %1934 = vmatprep.subr.mxu0 0.0
  %1935 = vmatpush1.msra.mxu0 %v1863
  %1936 = vmatprep.subr.mxu0 0.0
  %1937 = vmatpush1.msra.mxu0 %v1862
  %1938 = vmatprep.subr.mxu0 0.0
  %1939 = vmatpush1.msra.mxu0 %v1861
  %1940 = vmatprep.subr.mxu0 0.0
  %1941 = vmatpush1.msra.mxu0 %v1860
  %1942 = vmatprep.subr.mxu0 0.0
  %1943 = vmatpush1.msra.mxu0 %v1859
  %1944 = vmatprep.subr.mxu0 0.0
  %1945 = vmatpush1.msra.mxu0 %v1858
  %1946 = vmatprep.subr.mxu0 0.0
  %1947 = vmatpush1.msra.mxu0 %v1857
  %1948 = vmatprep.subr.mxu0 0.0
  %1949 = vmatpush1.msra.mxu0 %v1856
  %1950 = vmatprep.subr.mxu0 0.0
  %1951 = vmatpush1.msra.mxu0 %v1855
  %1952 = vmatprep.subr.mxu0 0.0
  %1953 = vmatpush1.msra.mxu0 %v1854
  %1954 = vmatprep.subr.mxu0 0.0
  %1955 = vmatpush2.msra.mxu0 %v1885
  %1956 = vmatprep.subr.mxu0 0.0
  %1957 = vmatpush2.msra.mxu0 %v1884
  %1958 = vmatprep.subr.mxu0 0.0
  %1959 = vmatpush2.msra.mxu0 %v1883
  %1960 = vmatprep.subr.mxu0 0.0
  %1961 = vmatpush2.msra.mxu0 %v1882
  %1962 = vmatprep.subr.mxu0 0.0
  %1963 = vmatpush2.msra.mxu0 %v1881
  %1964 = vmatprep.subr.mxu0 0.0
  %1965 = vmatpush2.msra.mxu0 %v1880
  %1966 = vmatprep.subr.mxu0 0.0
  %1967 = vmatpush2.msra.mxu0 %v1879
  %1968 = vmatprep.subr.mxu0 0.0
  %1969 = vmatpush2.msra.mxu0 %v1878
  %1970 = vmatprep.subr.mxu0 0.0
  %1971 = vmatpush2.msra.mxu0 %v1877
  %1972 = vmatprep.subr.mxu0 0.0
  %1973 = vmatpush2.msra.mxu0 %v1876
  %1974 = vmatprep.subr.mxu0 0.0
  %1975 = vmatpush2.msra.mxu0 %v1875
  %1976 = vmatprep.subr.mxu0 0.0
  %1977 = vmatpush2.msra.mxu0 %v1874
  %1978 = vmatprep.subr.mxu0 0.0
  %1979 = vmatpush2.msra.mxu0 %v1873
  %1980 = vmatprep.subr.mxu0 0.0
  %1981 = vmatpush2.msra.mxu0 %v1872
  %1982 = vmatprep.subr.mxu0 0.0
  %1983 = vmatpush2.msra.mxu0 %v1871
  %1984 = vmatprep.subr.mxu0 0.0
  %1985 = vmatpush2.msra.mxu0 %v1870
  %1986 = vmatprep.mubr.f32.mxu0 %v1371
  %1987 = vmatmul.mubr.f32.gmra.mxu0 %v1370
  %v1988 = vpop.f32.mrf.mxu0
  %v1989 = vadd.f32 %v1920, %v1988
  %v1990 = vpop.f32.mrf.mxu0
  %1991 = vmatprep.mubr.f32.mxu0 %v1375
  %1992 = vmatmul.mubr.f32.gmra.mxu0 %v1374
  %v1993 = vpop.f32.mrf.mxu0
  %v1994 = vadd.f32 %v1920, %v1993
  %v1995 = vpop.f32.mrf.mxu0
  %1996 = vdwg.mxu0
  %1997 = vmatprep.subr.mxu0 0.0
  %1998 = vmatpush1.msra.mxu0 %v1901
  %1999 = vmatprep.subr.mxu0 0.0
  %2000 = vmatpush1.msra.mxu0 %v1900
  %2001 = vmatprep.subr.mxu0 0.0
  %2002 = vmatpush1.msra.mxu0 %v1899
  %2003 = vmatprep.subr.mxu0 0.0
  %2004 = vmatpush1.msra.mxu0 %v1898
  %2005 = vmatprep.subr.mxu0 0.0
  %2006 = vmatpush1.msra.mxu0 %v1897
  %2007 = vmatprep.subr.mxu0 0.0
  %2008 = vmatpush1.msra.mxu0 %v1896
  %2009 = vmatprep.subr.mxu0 0.0
  %2010 = vmatpush1.msra.mxu0 %v1895
  %2011 = vmatprep.subr.mxu0 0.0
  %2012 = vmatpush1.msra.mxu0 %v1894
  %2013 = vmatprep.subr.mxu0 0.0
  %2014 = vmatpush1.msra.mxu0 %v1893
  %2015 = vmatprep.subr.mxu0 0.0
  %2016 = vmatpush1.msra.mxu0 %v1892
  %2017 = vmatprep.subr.mxu0 0.0
  %2018 = vmatpush1.msra.mxu0 %v1891
  %2019 = vmatprep.subr.mxu0 0.0
  %2020 = vmatpush1.msra.mxu0 %v1890
  %2021 = vmatprep.subr.mxu0 0.0
  %2022 = vmatpush1.msra.mxu0 %v1889
  %2023 = vmatprep.subr.mxu0 0.0
  %2024 = vmatpush1.msra.mxu0 %v1888
  %2025 = vmatprep.subr.mxu0 0.0
  %2026 = vmatpush1.msra.mxu0 %v1887
  %2027 = vmatprep.subr.mxu0 0.0
  %2028 = vmatpush1.msra.mxu0 %v1886
  %2029 = vmatprep.subr.mxu0 0.0
  %2030 = vmatpush2.msra.mxu0 0.0
  %2031 = vmatprep.subr.mxu0 0.0
  %2032 = vmatpush2.msra.mxu0 0.0
  %2033 = vmatprep.subr.mxu0 0.0
  %2034 = vmatpush2.msra.mxu0 0.0
  %2035 = vmatprep.subr.mxu0 0.0
  %2036 = vmatpush2.msra.mxu0 0.0
  %2037 = vmatprep.subr.mxu0 0.0
  %2038 = vmatpush2.msra.mxu0 %v1913
  %2039 = vmatprep.subr.mxu0 0.0
  %2040 = vmatpush2.msra.mxu0 %v1912
  %2041 = vmatprep.subr.mxu0 0.0
  %2042 = vmatpush2.msra.mxu0 %v1911
  %2043 = vmatprep.subr.mxu0 0.0
  %2044 = vmatpush2.msra.mxu0 %v1910
  %2045 = vmatprep.subr.mxu0 0.0
  %2046 = vmatpush2.msra.mxu0 %v1909
  %2047 = vmatprep.subr.mxu0 0.0
  %2048 = vmatpush2.msra.mxu0 %v1908
  %2049 = vmatprep.subr.mxu0 0.0
  %2050 = vmatpush2.msra.mxu0 %v1907
  %2051 = vmatprep.subr.mxu0 0.0
  %2052 = vmatpush2.msra.mxu0 %v1906
  %2053 = vmatprep.subr.mxu0 0.0
  %2054 = vmatpush2.msra.mxu0 %v1905
  %2055 = vmatprep.subr.mxu0 0.0
  %2056 = vmatpush2.msra.mxu0 %v1904
  %2057 = vmatprep.subr.mxu0 0.0
  %2058 = vmatpush2.msra.mxu0 %v1903
  %2059 = vmatprep.subr.mxu0 0.0
  %2060 = vmatpush2.msra.mxu0 %v1902
  %2061 = vmatprep.mubr.f32.mxu0 %v1450
  %2062 = vmatmul.mubr.f32.gmra.mxu0 %v1372
  %v2063 = vpop.f32.mrf.mxu0
  %v2064 = vadd.f32 %v1989, %v2063
  %v2065 = vpop.f32.mrf.mxu0
  %2066 = vmatprep.mubr.f32.mxu0 %v1453
  %2067 = vmatmul.mubr.f32.gmra.mxu0 %v1376
  %v2068 = vpop.f32.mrf.mxu0
  %v2069 = vadd.f32 %v1994, %v2068
  %v2070 = vpop.f32.mrf.mxu0
  %2071 = vdwg.mxu0
  %v2072 = vxor.u32 %v2064, 2147483648
  %v2073 = vxor.u32 %v2069, 2147483648
  %v2074 = vmul.f32 %v2072, 1.442695
  %v2075 = vpow.pop %v2074
  %v2076 = vmul.f32 %v2073, 1.442695
  %v2077 = vpow.pop %v2076
  %v2078 = vadd.f32 %v2075, 1.0
  %v2079 = vadd.f32 %v2077, 1.0
  %v2080 = vrcp.pop %v2078
  %v2081 = vmul.f32 1.0, %v2080
  %v2082 = vrcp.pop %v2079
  %v2083 = vmul.f32 1.0, %v2082
  %s2084 = scalar_lea.vmem %s7, 16
  %2085 = vst.msk [vmem:[%s2084] sm:$0xff] %vm1078, %v2081
  %2086 = vst.msk [vmem:[%s2084 + $0x18] sm:$0xff] %vm1078, %v2083
  // Predicated region
  $region90: #{rn_forward.1} parent=0 // pred_check
    _
  $region91: #{rn_forward.1} parent=0 // pred_check_branch
    %2088 = sbr.rel (0) target = $region93
  $region92: #{rn_forward.1} parent=0 // pred_region
    _
  $region93: #{rn_forward.1} parent=0 // pred_fallthru
    _
  // Predicated region
  $region94: #{rn_forward.1} parent=0 // pred_check
    _
  $region95: #{rn_forward.1} parent=0 // pred_check_branch
    %2090 = sbr.rel (0) target = $region97
  $region96: #{rn_forward.1} parent=0 // pred_region
    _
  $region97: #{rn_forward.1} parent=0 // pred_fallthru
    _
  %2091 = vsyncmov [#allocation8]
  %s2092 = vpop.sfrf %2091
  %p2093 = scmp.eq.s32.totalorder %s2092, 0
  %p2094 = pneg %p2093
  %2096 = shalt.err (%p2094)
  %s2097 = scalar_lea.sflag [#allocation8], 1
  %2098 = vsyncmov %s2097
  %s2099 = vpop.sfrf %2098
  %p2100 = scmp.eq.s32.totalorder %s2099, 0
  %p2101 = pneg %p2100
  %2103 = shalt.err (%p2101)

</llo_original>
